<compile_context>
chip_gen: v7x
topology: tpu7x:2x2x1
jax: 0.10.0
libtpu: 0.0.40
codegen_flags: <defaults>
</compile_context>

<pallas_src>
import functools

import jax
import jax.numpy as jnp
from jax.experimental import pallas as pl
from jax.experimental.pallas import tpu as pltpu


def _round_up(x, m):
    return (x + m - 1) // m * m


# ---------------------------------------------------------------------------
# Kernel 1: sequential tanh-RNN recurrence, TT time steps per grid block.
# ---------------------------------------------------------------------------
def rnn_recurrence_kernel(ids_ref,                          # SMEM (T_pad*B,) int32 token ids
                          h0_ref, wih_ref, whh_ref, bh_ref,  # VMEM inputs
                          hs_ref, hn_ref,                    # VMEM outputs
                          h_scratch,                         # VMEM scratch (persists across grid)
                          *, steps_per_block, batch, batch_pad, hidden, seq_len):
    blk = pl.program_id(0)

    @pl.when(blk == 0)
    def _():
        h_scratch[...] = h0_ref[...]

    whh = whh_ref[...]                                       # (H, H) resident weight
    bh = bh_ref[...]                                         # (1, H)
    # Sublane index column, hoisted out of the loop (used to place gathered rows).
    sub = jax.lax.broadcasted_iota(jnp.int32, (batch_pad, 1), 0)

    def step(i, h):
        t = blk * steps_per_block + i
        base = t * batch
        # Row gather of W_ih^T driven by scalar-prefetched ids: replaces the
        # one-hot (B,V)x(V,H) matmul and the (T,B,V) one-hot HBM stream.
        x_proj = jnp.zeros((batch_pad, hidden), jnp.float32)
        for b in range(batch):
            row = wih_ref[ids_ref[base + b]]                 # (1, H) gathered row
            x_proj = x_proj + jnp.where(sub == b, row, 0.0)  # place into sublane b

        pre = x_proj + jnp.dot(h, whh, preferred_element_type=jnp.float32) + bh
        h_new = jnp.tanh(pre)
        hs_ref[i] = h_new.astype(hs_ref.dtype)
        # Padded (t >= seq_len) steps must not advance the carried state.
        return jnp.where(t < seq_len, h_new, h)

    h = jax.lax.fori_loop(0, steps_per_block, step, h_scratch[...], unroll=True)
    h_scratch[...] = h

    @pl.when(blk == pl.num_programs(0) - 1)
    def _():
        hn_ref[...] = h.astype(hn_ref.dtype)


# ---------------------------------------------------------------------------
# Kernel 2: dense vocab decoder, one big lane-dense matmul (parallel grid).
# ---------------------------------------------------------------------------
def decoder_kernel(h_ref, wd_ref, bd_ref, y_ref):
    y_ref[...] = (jnp.dot(h_ref[...], wd_ref[...],
                          preferred_element_type=jnp.float32)
                  + bd_ref[...]).astype(y_ref.dtype)


def rnn_model_forward(inputs, state, params, vocab_size, num_hiddens,
                      *, steps_per_block=8):
    """inputs: (B, T) int32 token ids; state: (1, B, H) float32 or None."""
    B, T = inputs.shape
    H, V = num_hiddens, vocab_size

    TT = steps_per_block
    n_blocks = pl.cdiv(T, TT)
    T_pad = n_blocks * TT
    B_pad = _round_up(B, 8)
    H_pad = _round_up(H, 128)
    V_pad = _round_up(V, 128)

    # ---- glue (plain JAX): id layout + zero-padded, pre-transposed params ----
    ids = inputs.T.astype(jnp.int32).reshape(-1)                       # (T*B,) time-major
    ids_flat = jnp.zeros((T_pad * B,), jnp.int32).at[:T * B].set(ids)  # pad ids -> token 0

    if state is None:
        h0 = jnp.zeros((B_pad, H_pad), jnp.float32)
    else:
        h0 = jnp.zeros((B_pad, H_pad), jnp.float32).at[:B, :H].set(
            state[0].astype(jnp.float32))

    wih_t = jnp.zeros((V, 1, H_pad), jnp.float32).at[:, 0, :H].set(params["w_ih"].T)
    whh_t = jnp.zeros((H_pad, H_pad), jnp.float32).at[:H, :H].set(params["w_hh"].T)
    bh = jnp.zeros((1, H_pad), jnp.float32).at[0, :H].set(params["b_ih"] + params["b_hh"])
    wd_t = jnp.zeros((H_pad, V_pad), jnp.float32).at[:H, :V].set(params["w_dense"].T)
    bd = jnp.zeros((1, V_pad), jnp.float32).at[0, :V].set(params["b_dense"])

    # ---- pass 1: sequential recurrence -> per-step hidden states ----
    rec_kernel = functools.partial(
        rnn_recurrence_kernel, steps_per_block=TT, batch=B, batch_pad=B_pad,
        hidden=H_pad, seq_len=T)

    grid_spec = pltpu.PrefetchScalarGridSpec(
        num_scalar_prefetch=1,                                         # token ids -> SMEM
        grid=(n_blocks,),
        in_specs=[
            pl.BlockSpec((B_pad, H_pad), lambda i, _ids: (0, 0)),          # h0
            pl.BlockSpec((V, 1, H_pad), lambda i, _ids: (0, 0, 0)),        # W_ih^T rows
            pl.BlockSpec((H_pad, H_pad), lambda i, _ids: (0, 0)),          # W_hh^T
            pl.BlockSpec((1, H_pad), lambda i, _ids: (0, 0)),              # b_ih + b_hh
        ],
        out_specs=[
            pl.BlockSpec((TT, B_pad, H_pad), lambda i, _ids: (i, 0, 0)),   # h_t slab
            pl.BlockSpec((B_pad, H_pad), lambda i, _ids: (0, 0)),          # final state
        ],
        scratch_shapes=[pltpu.VMEM((B_pad, H_pad), jnp.float32)],
    )

    hs, hn = pl.pallas_call(
        rec_kernel,
        grid_spec=grid_spec,
        out_shape=(
            jax.ShapeDtypeStruct((T_pad, B_pad, H_pad), jnp.float32),
            jax.ShapeDtypeStruct((B_pad, H_pad), jnp.float32),
        ),
        compiler_params=pltpu.CompilerParams(
            dimension_semantics=("arbitrary",),        # sequential recurrence
        ),
    )(ids_flat, h0, wih_t, whh_t, bh)

    # ---- pass 2: decoder hoisted out of the serial loop, one tiled matmul ----
    M_pad = T_pad * B_pad
    m_tile = TT * B_pad                                # divides M_pad exactly
    h2d = hs.reshape(M_pad, H_pad)

    y_pad = pl.pallas_call(
        decoder_kernel,
        grid_spec=pltpu.PrefetchScalarGridSpec(
            num_scalar_prefetch=0,
            grid=(M_pad // m_tile,),
            in_specs=[
                pl.BlockSpec((m_tile, H_pad), lambda m: (m, 0)),
                pl.BlockSpec((H_pad, V_pad), lambda m: (0, 0)),
                pl.BlockSpec((1, V_pad), lambda m: (0, 0)),
            ],
            out_specs=pl.BlockSpec((m_tile, V_pad), lambda m: (m, 0)),
        ),
        out_shape=jax.ShapeDtypeStruct((M_pad, V_pad), jnp.float32),
        compiler_params=pltpu.CompilerParams(
            dimension_semantics=("parallel",),         # shards across TCs on v7x
        ),
    )(h2d, wd_t, bd)

    # ---- crop padding back to the PyTorch shapes ----
    output = y_pad.reshape(T_pad, B_pad, V_pad)[:T, :B, :V].reshape(T * B, V)
    state_out = hn[:B, :H][None, :, :]                 # (1, B, H) like nn.RNN
    return output, state_out


def rnn_model_reference(inputs, state, params, vocab_size, num_hiddens):
    """Pure-JAX reference matching PyTorch nn.RNN + Linear."""
    B, T = inputs.shape
    H = num_hiddens
    ids = inputs.T                                     # (T, B)
    x_proj = params["w_ih"].T[ids]                     # (T, B, H) == one_hot @ W_ih^T
    h = jnp.zeros((B, H), jnp.float32) if state is None else state[0]

    def step(h, xp):
        h_new = jnp.tanh(xp + params["b_ih"] + h @ params["w_hh"].T + params["b_hh"])
        return h_new, h_new

    h_last, ys = jax.lax.scan(step, h, x_proj)         # ys: (T, B, H)
    out = ys.reshape(T * B, H) @ params["w_dense"].T + params["b_dense"]
    return out, h_last[None, :, :]


if __name__ == "__main__":
    # Small, deterministic problem sizes (matching the PyTorch spec where given).
    batch_size = 2
    num_steps = 35
    vocab_size = 32
    num_hiddens = 256

    key = jax.random.PRNGKey(0)
    k_in, k_h0, k1, k2, k3, k4, k5, k6 = jax.random.split(key, 8)

    # PyTorch-style init: U(-1/sqrt(H), 1/sqrt(H)) for RNN and Linear params.
    s = 1.0 / (num_hiddens ** 0.5)
    params = {
        "w_ih": jax.random.uniform(k1, (num_hiddens, vocab_size), jnp.float32, -s, s),
        "w_hh": jax.random.uniform(k2, (num_hiddens, num_hiddens), jnp.float32, -s, s),
        "b_ih": jax.random.uniform(k3, (num_hiddens,), jnp.float32, -s, s),
        "b_hh": jax.random.uniform(k4, (num_hiddens,), jnp.float32, -s, s),
        "w_dense": jax.random.uniform(k5, (vocab_size, num_hiddens), jnp.float32, -s, s),
        "b_dense": jax.random.uniform(k6, (vocab_size,), jnp.float32, -s, s),
    }

    inputs = jax.random.randint(k_in, (batch_size, num_steps), 0, vocab_size, jnp.int32)
    state = jax.random.normal(k_h0, (1, batch_size, num_hiddens), jnp.float32) * 0.1

    out, new_state = rnn_model_forward(inputs, state, params, vocab_size, num_hiddens)
    out = jax.block_until_ready(out)
    new_state = jax.block_until_ready(new_state)

    ref_out, ref_state = rnn_model_reference(inputs, state, params, vocab_size, num_hiddens)

    assert out.shape == (num_steps * batch_size, vocab_size), out.shape
    assert new_state.shape == (1, batch_size, num_hiddens), new_state.shape
    assert jnp.allclose(out, ref_out, atol=1e-4, rtol=1e-4), \
        float(jnp.max(jnp.abs(out - ref_out)))
    assert jnp.allclose(new_state, ref_state, atol=1e-4, rtol=1e-4), \
        float(jnp.max(jnp.abs(new_state - ref_state)))

    print("KERNEL_OK")
</pallas_src>

<mosaic_0001>
module attributes {stable_mosaic.version = 11 : i64} {
  func.func @rnn_recurrence_kernel(%arg0: i32, %arg1: memref<80xi32, #tpu.memory_space<smem>>, %arg2: memref<8x256xf32, #tpu.memory_space<vmem>>, %arg3: memref<32x1x256xf32, #tpu.memory_space<vmem>>, %arg4: memref<256x256xf32, #tpu.memory_space<vmem>>, %arg5: memref<1x256xf32, #tpu.memory_space<vmem>>, %arg6: memref<8x8x256xf32, #tpu.memory_space<vmem>>, %arg7: memref<8x256xf32, #tpu.memory_space<vmem>>, %arg8: memref<8x256xf32, #tpu.memory_space<vmem>>) attributes {dimension_semantics = [#tpu.dimension_semantics<arbitrary>], iteration_bounds = array<i64: 5>, scalar_prefetch = 1 : i64, scratch_operands = 1 : i64, tpu.core_type = #tpu.core_type<tc>, window_params = [{pipeline_mode = #tpu.pipeline_mode<synchronous>, transform_indices = @transform_0, window_bounds = array<i64: 8, 256>}, {pipeline_mode = #tpu.pipeline_mode<synchronous>, transform_indices = @transform_1, window_bounds = array<i64: 32, 1, 256>}, {pipeline_mode = #tpu.pipeline_mode<synchronous>, transform_indices = @transform_2, window_bounds = array<i64: 256, 256>}, {pipeline_mode = #tpu.pipeline_mode<synchronous>, transform_indices = @transform_3, window_bounds = array<i64: 1, 256>}, {transform_indices = @transform_4, window_bounds = array<i64: 8, 8, 256>}, {pipeline_mode = #tpu.pipeline_mode<synchronous>, transform_indices = @transform_5, window_bounds = array<i64: 8, 256>}]} {
    %c0_i32 = arith.constant 0 : i32
    %0 = arith.cmpi eq, %arg0, %c0_i32 : i32
    %1 = arith.extui %0 : i1 to i32
    %c0_i32_0 = arith.constant 0 : i32
    %2 = arith.cmpi ne, %1, %c0_i32_0 : i32
    scf.if %2 {
      %c0_145 = arith.constant 0 : index
      %c0_146 = arith.constant 0 : index
      %371 = vector.load %arg2[%c0_145, %c0_146] : memref<8x256xf32, #tpu.memory_space<vmem>>, vector<8x256xf32>
      %c0_147 = arith.constant 0 : index
      %c0_148 = arith.constant 0 : index
      %372 = vector.load %arg8[%c0_147, %c0_148] : memref<8x256xf32, #tpu.memory_space<vmem>>, vector<8x256xf32>
      tpu.vector_store %arg8[%c0_147, %c0_148], %371 {strides = array<i32>} : memref<8x256xf32, #tpu.memory_space<vmem>>, vector<8x256xf32>,
    } else {
    }
    %c0 = arith.constant 0 : index
    %c0_1 = arith.constant 0 : index
    %3 = vector.load %arg4[%c0, %c0_1] : memref<256x256xf32, #tpu.memory_space<vmem>>, vector<256x256xf32>
    %c0_2 = arith.constant 0 : index
    %c0_3 = arith.constant 0 : index
    %4 = vector.load %arg5[%c0_2, %c0_3] : memref<1x256xf32, #tpu.memory_space<vmem>>, vector<1x256xf32>
    %5 = tpu.iota {dimensions = array<i32: 0>} : vector<8x1xi32>
    %c0_4 = arith.constant 0 : index
    %c0_5 = arith.constant 0 : index
    %6 = vector.load %arg8[%c0_4, %c0_5] : memref<8x256xf32, #tpu.memory_space<vmem>>, vector<8x256xf32>
    %c0_i32_6 = arith.constant 0 : i32
    %c8_i32 = arith.constant 8 : i32
    %7 = arith.muli %arg0, %c8_i32 : i32
    %8 = arith.addi %7, %c0_i32_6 : i32
    %c2_i32 = arith.constant 2 : i32
    %9 = arith.muli %8, %c2_i32 : i32
    %cst = arith.constant 0.000000e+00 : f32
    %10 = vector.broadcast %cst : f32 to vector<8x256xf32>
    %c0_i32_7 = arith.constant 0 : i32
    %11 = arith.addi %9, %c0_i32_7 : i32
    %12 = arith.index_cast %11 : i32 to index
    %13 = memref.load %arg1[%12] : memref<80xi32, #tpu.memory_space<smem>>
    %14 = arith.index_cast %13 : i32 to index
    %c0_8 = arith.constant 0 : index
    %c0_9 = arith.constant 0 : index
    %15 = vector.load %arg3[%14, %c0_8, %c0_9] : memref<32x1x256xf32, #tpu.memory_space<vmem>>, vector<1x1x256xf32>
    %16 = vector.shape_cast %15 : vector<1x1x256xf32> to vector<1x256xf32>
    %c0_i32_10 = arith.constant 0 : i32
    %17 = vector.broadcast %c0_i32_10 : i32 to vector<8x1xi32>
    %18 = arith.cmpi eq, %5, %17 : vector<8x1xi32>
    %cst_11 = arith.constant 0.000000e+00 : f32
    %19 = vector.shape_cast %18 : vector<8x1xi1> to vector<8x1xi1>
    %20 = vector.broadcast %19 : vector<8x1xi1> to vector<8x256xi1>
    %21 = vector.shape_cast %16 : vector<1x256xf32> to vector<1x256xf32>
    %22 = vector.broadcast %21 : vector<1x256xf32> to vector<8x256xf32>
    %23 = vector.broadcast %cst_11 : f32 to vector<8x256xf32>
    %24 = arith.select %20, %22, %23 : vector<8x256xi1>, vector<8x256xf32>
    %25 = arith.addf %10, %24 : vector<8x256xf32>
    %c1_i32 = arith.constant 1 : i32
    %26 = arith.addi %9, %c1_i32 : i32
    %27 = arith.index_cast %26 : i32 to index
    %28 = memref.load %arg1[%27] : memref<80xi32, #tpu.memory_space<smem>>
    %29 = arith.index_cast %28 : i32 to index
    %c0_12 = arith.constant 0 : index
    %c0_13 = arith.constant 0 : index
    %30 = vector.load %arg3[%29, %c0_12, %c0_13] : memref<32x1x256xf32, #tpu.memory_space<vmem>>, vector<1x1x256xf32>
    %31 = vector.shape_cast %30 : vector<1x1x256xf32> to vector<1x256xf32>
    %c1_i32_14 = arith.constant 1 : i32
    %32 = vector.broadcast %c1_i32_14 : i32 to vector<8x1xi32>
    %33 = arith.cmpi eq, %5, %32 : vector<8x1xi32>
    %cst_15 = arith.constant 0.000000e+00 : f32
    %34 = vector.shape_cast %33 : vector<8x1xi1> to vector<8x1xi1>
    %35 = vector.broadcast %34 : vector<8x1xi1> to vector<8x256xi1>
    %36 = vector.shape_cast %31 : vector<1x256xf32> to vector<1x256xf32>
    %37 = vector.broadcast %36 : vector<1x256xf32> to vector<8x256xf32>
    %38 = vector.broadcast %cst_15 : f32 to vector<8x256xf32>
    %39 = arith.select %35, %37, %38 : vector<8x256xi1>, vector<8x256xf32>
    %40 = arith.addf %25, %39 : vector<8x256xf32>
    %cst_16 = arith.constant dense<0.000000e+00> : vector<8x256xf32>
    %41 = tpu.matmul %6, %3, %cst_16 {dimension_numbers = #tpu.dot_dimension_numbers<[1], [0], [0], [1], [0, 0, 1, 1], [], []>} : vector<8x256xf32>, vector<256x256xf32>, vector<8x256xf32> -> vector<8x256xf32>
    %42 = arith.addf %40, %41 : vector<8x256xf32>
    %43 = vector.broadcast %4 : vector<1x256xf32> to vector<8x256xf32>
    %44 = arith.addf %42, %43 : vector<8x256xf32>
    %45 = math.tanh %44 : vector<8x256xf32>
    %46 = arith.index_cast %c0_i32_6 : i32 to index
    %c0_17 = arith.constant 0 : index
    %c0_18 = arith.constant 0 : index
    %47 = vector.load %arg6[%46, %c0_17, %c0_18] : memref<8x8x256xf32, #tpu.memory_space<vmem>>, vector<1x8x256xf32>
    %48 = vector.shape_cast %47 : vector<1x8x256xf32> to vector<8x256xf32>
    %49 = vector.shape_cast %45 : vector<8x256xf32> to vector<1x8x256xf32>
    tpu.vector_store %arg6[%46, %c0_17, %c0_18], %49 {strides = array<i32>} : memref<8x8x256xf32, #tpu.memory_space<vmem>>, vector<1x8x256xf32>,
    %c35_i32 = arith.constant 35 : i32
    %50 = arith.cmpi slt, %8, %c35_i32 : i32
    %51 = arith.select %50, %45, %6 : vector<8x256xf32>
    %c1_i32_19 = arith.constant 1 : i32
    %c8_i32_20 = arith.constant 8 : i32
    %52 = arith.muli %arg0, %c8_i32_20 : i32
    %53 = arith.addi %52, %c1_i32_19 : i32
    %c2_i32_21 = arith.constant 2 : i32
    %54 = arith.muli %53, %c2_i32_21 : i32
    %cst_22 = arith.constant 0.000000e+00 : f32
    %55 = vector.broadcast %cst_22 : f32 to vector<8x256xf32>
    %c0_i32_23 = arith.constant 0 : i32
    %56 = arith.addi %54, %c0_i32_23 : i32
    %57 = arith.index_cast %56 : i32 to index
    %58 = memref.load %arg1[%57] : memref<80xi32, #tpu.memory_space<smem>>
    %59 = arith.index_cast %58 : i32 to index
    %c0_24 = arith.constant 0 : index
    %c0_25 = arith.constant 0 : index
    %60 = vector.load %arg3[%59, %c0_24, %c0_25] : memref<32x1x256xf32, #tpu.memory_space<vmem>>, vector<1x1x256xf32>
    %61 = vector.shape_cast %60 : vector<1x1x256xf32> to vector<1x256xf32>
    %c0_i32_26 = arith.constant 0 : i32
    %62 = vector.broadcast %c0_i32_26 : i32 to vector<8x1xi32>
    %63 = arith.cmpi eq, %5, %62 : vector<8x1xi32>
    %cst_27 = arith.constant 0.000000e+00 : f32
    %64 = vector.shape_cast %63 : vector<8x1xi1> to vector<8x1xi1>
    %65 = vector.broadcast %64 : vector<8x1xi1> to vector<8x256xi1>
    %66 = vector.shape_cast %61 : vector<1x256xf32> to vector<1x256xf32>
    %67 = vector.broadcast %66 : vector<1x256xf32> to vector<8x256xf32>
    %68 = vector.broadcast %cst_27 : f32 to vector<8x256xf32>
    %69 = arith.select %65, %67, %68 : vector<8x256xi1>, vector<8x256xf32>
    %70 = arith.addf %55, %69 : vector<8x256xf32>
    %c1_i32_28 = arith.constant 1 : i32
    %71 = arith.addi %54, %c1_i32_28 : i32
    %72 = arith.index_cast %71 : i32 to index
    %73 = memref.load %arg1[%72] : memref<80xi32, #tpu.memory_space<smem>>
    %74 = arith.index_cast %73 : i32 to index
    %c0_29 = arith.constant 0 : index
    %c0_30 = arith.constant 0 : index
    %75 = vector.load %arg3[%74, %c0_29, %c0_30] : memref<32x1x256xf32, #tpu.memory_space<vmem>>, vector<1x1x256xf32>
    %76 = vector.shape_cast %75 : vector<1x1x256xf32> to vector<1x256xf32>
    %c1_i32_31 = arith.constant 1 : i32
    %77 = vector.broadcast %c1_i32_31 : i32 to vector<8x1xi32>
    %78 = arith.cmpi eq, %5, %77 : vector<8x1xi32>
    %cst_32 = arith.constant 0.000000e+00 : f32
    %79 = vector.shape_cast %78 : vector<8x1xi1> to vector<8x1xi1>
    %80 = vector.broadcast %79 : vector<8x1xi1> to vector<8x256xi1>
    %81 = vector.shape_cast %76 : vector<1x256xf32> to vector<1x256xf32>
    %82 = vector.broadcast %81 : vector<1x256xf32> to vector<8x256xf32>
    %83 = vector.broadcast %cst_32 : f32 to vector<8x256xf32>
    %84 = arith.select %80, %82, %83 : vector<8x256xi1>, vector<8x256xf32>
    %85 = arith.addf %70, %84 : vector<8x256xf32>
    %cst_33 = arith.constant dense<0.000000e+00> : vector<8x256xf32>
    %86 = tpu.matmul %51, %3, %cst_33 {dimension_numbers = #tpu.dot_dimension_numbers<[1], [0], [0], [1], [0, 0, 1, 1], [], []>} : vector<8x256xf32>, vector<256x256xf32>, vector<8x256xf32> -> vector<8x256xf32>
    %87 = arith.addf %85, %86 : vector<8x256xf32>
    %88 = vector.broadcast %4 : vector<1x256xf32> to vector<8x256xf32>
    %89 = arith.addf %87, %88 : vector<8x256xf32>
    %90 = math.tanh %89 : vector<8x256xf32>
    %91 = arith.index_cast %c1_i32_19 : i32 to index
    %c0_34 = arith.constant 0 : index
    %c0_35 = arith.constant 0 : index
    %92 = vector.load %arg6[%91, %c0_34, %c0_35] : memref<8x8x256xf32, #tpu.memory_space<vmem>>, vector<1x8x256xf32>
    %93 = vector.shape_cast %92 : vector<1x8x256xf32> to vector<8x256xf32>
    %94 = vector.shape_cast %90 : vector<8x256xf32> to vector<1x8x256xf32>
    tpu.vector_store %arg6[%91, %c0_34, %c0_35], %94 {strides = array<i32>} : memref<8x8x256xf32, #tpu.memory_space<vmem>>, vector<1x8x256xf32>,
    %c35_i32_36 = arith.constant 35 : i32
    %95 = arith.cmpi slt, %53, %c35_i32_36 : i32
    %96 = arith.select %95, %90, %51 : vector<8x256xf32>
    %c2_i32_37 = arith.constant 2 : i32
    %c8_i32_38 = arith.constant 8 : i32
    %97 = arith.muli %arg0, %c8_i32_38 : i32
    %98 = arith.addi %97, %c2_i32_37 : i32
    %c2_i32_39 = arith.constant 2 : i32
    %99 = arith.muli %98, %c2_i32_39 : i32
    %cst_40 = arith.constant 0.000000e+00 : f32
    %100 = vector.broadcast %cst_40 : f32 to vector<8x256xf32>
    %c0_i32_41 = arith.constant 0 : i32
    %101 = arith.addi %99, %c0_i32_41 : i32
    %102 = arith.index_cast %101 : i32 to index
    %103 = memref.load %arg1[%102] : memref<80xi32, #tpu.memory_space<smem>>
    %104 = arith.index_cast %103 : i32 to index
    %c0_42 = arith.constant 0 : index
    %c0_43 = arith.constant 0 : index
    %105 = vector.load %arg3[%104, %c0_42, %c0_43] : memref<32x1x256xf32, #tpu.memory_space<vmem>>, vector<1x1x256xf32>
    %106 = vector.shape_cast %105 : vector<1x1x256xf32> to vector<1x256xf32>
    %c0_i32_44 = arith.constant 0 : i32
    %107 = vector.broadcast %c0_i32_44 : i32 to vector<8x1xi32>
    %108 = arith.cmpi eq, %5, %107 : vector<8x1xi32>
    %cst_45 = arith.constant 0.000000e+00 : f32
    %109 = vector.shape_cast %108 : vector<8x1xi1> to vector<8x1xi1>
    %110 = vector.broadcast %109 : vector<8x1xi1> to vector<8x256xi1>
    %111 = vector.shape_cast %106 : vector<1x256xf32> to vector<1x256xf32>
    %112 = vector.broadcast %111 : vector<1x256xf32> to vector<8x256xf32>
    %113 = vector.broadcast %cst_45 : f32 to vector<8x256xf32>
    %114 = arith.select %110, %112, %113 : vector<8x256xi1>, vector<8x256xf32>
    %115 = arith.addf %100, %114 : vector<8x256xf32>
    %c1_i32_46 = arith.constant 1 : i32
    %116 = arith.addi %99, %c1_i32_46 : i32
    %117 = arith.index_cast %116 : i32 to index
    %118 = memref.load %arg1[%117] : memref<80xi32, #tpu.memory_space<smem>>
    %119 = arith.index_cast %118 : i32 to index
    %c0_47 = arith.constant 0 : index
    %c0_48 = arith.constant 0 : index
    %120 = vector.load %arg3[%119, %c0_47, %c0_48] : memref<32x1x256xf32, #tpu.memory_space<vmem>>, vector<1x1x256xf32>
    %121 = vector.shape_cast %120 : vector<1x1x256xf32> to vector<1x256xf32>
    %c1_i32_49 = arith.constant 1 : i32
    %122 = vector.broadcast %c1_i32_49 : i32 to vector<8x1xi32>
    %123 = arith.cmpi eq, %5, %122 : vector<8x1xi32>
    %cst_50 = arith.constant 0.000000e+00 : f32
    %124 = vector.shape_cast %123 : vector<8x1xi1> to vector<8x1xi1>
    %125 = vector.broadcast %124 : vector<8x1xi1> to vector<8x256xi1>
    %126 = vector.shape_cast %121 : vector<1x256xf32> to vector<1x256xf32>
    %127 = vector.broadcast %126 : vector<1x256xf32> to vector<8x256xf32>
    %128 = vector.broadcast %cst_50 : f32 to vector<8x256xf32>
    %129 = arith.select %125, %127, %128 : vector<8x256xi1>, vector<8x256xf32>
    %130 = arith.addf %115, %129 : vector<8x256xf32>
    %cst_51 = arith.constant dense<0.000000e+00> : vector<8x256xf32>
    %131 = tpu.matmul %96, %3, %cst_51 {dimension_numbers = #tpu.dot_dimension_numbers<[1], [0], [0], [1], [0, 0, 1, 1], [], []>} : vector<8x256xf32>, vector<256x256xf32>, vector<8x256xf32> -> vector<8x256xf32>
    %132 = arith.addf %130, %131 : vector<8x256xf32>
    %133 = vector.broadcast %4 : vector<1x256xf32> to vector<8x256xf32>
    %134 = arith.addf %132, %133 : vector<8x256xf32>
    %135 = math.tanh %134 : vector<8x256xf32>
    %136 = arith.index_cast %c2_i32_37 : i32 to index
    %c0_52 = arith.constant 0 : index
    %c0_53 = arith.constant 0 : index
    %137 = vector.load %arg6[%136, %c0_52, %c0_53] : memref<8x8x256xf32, #tpu.memory_space<vmem>>, vector<1x8x256xf32>
    %138 = vector.shape_cast %137 : vector<1x8x256xf32> to vector<8x256xf32>
    %139 = vector.shape_cast %135 : vector<8x256xf32> to vector<1x8x256xf32>
    tpu.vector_store %arg6[%136, %c0_52, %c0_53], %139 {strides = array<i32>} : memref<8x8x256xf32, #tpu.memory_space<vmem>>, vector<1x8x256xf32>,
    %c35_i32_54 = arith.constant 35 : i32
    %140 = arith.cmpi slt, %98, %c35_i32_54 : i32
    %141 = arith.select %140, %135, %96 : vector<8x256xf32>
    %c3_i32 = arith.constant 3 : i32
    %c8_i32_55 = arith.constant 8 : i32
    %142 = arith.muli %arg0, %c8_i32_55 : i32
    %143 = arith.addi %142, %c3_i32 : i32
    %c2_i32_56 = arith.constant 2 : i32
    %144 = arith.muli %143, %c2_i32_56 : i32
    %cst_57 = arith.constant 0.000000e+00 : f32
    %145 = vector.broadcast %cst_57 : f32 to vector<8x256xf32>
    %c0_i32_58 = arith.constant 0 : i32
    %146 = arith.addi %144, %c0_i32_58 : i32
    %147 = arith.index_cast %146 : i32 to index
    %148 = memref.load %arg1[%147] : memref<80xi32, #tpu.memory_space<smem>>
    %149 = arith.index_cast %148 : i32 to index
    %c0_59 = arith.constant 0 : index
    %c0_60 = arith.constant 0 : index
    %150 = vector.load %arg3[%149, %c0_59, %c0_60] : memref<32x1x256xf32, #tpu.memory_space<vmem>>, vector<1x1x256xf32>
    %151 = vector.shape_cast %150 : vector<1x1x256xf32> to vector<1x256xf32>
    %c0_i32_61 = arith.constant 0 : i32
    %152 = vector.broadcast %c0_i32_61 : i32 to vector<8x1xi32>
    %153 = arith.cmpi eq, %5, %152 : vector<8x1xi32>
    %cst_62 = arith.constant 0.000000e+00 : f32
    %154 = vector.shape_cast %153 : vector<8x1xi1> to vector<8x1xi1>
    %155 = vector.broadcast %154 : vector<8x1xi1> to vector<8x256xi1>
    %156 = vector.shape_cast %151 : vector<1x256xf32> to vector<1x256xf32>
    %157 = vector.broadcast %156 : vector<1x256xf32> to vector<8x256xf32>
    %158 = vector.broadcast %cst_62 : f32 to vector<8x256xf32>
    %159 = arith.select %155, %157, %158 : vector<8x256xi1>, vector<8x256xf32>
    %160 = arith.addf %145, %159 : vector<8x256xf32>
    %c1_i32_63 = arith.constant 1 : i32
    %161 = arith.addi %144, %c1_i32_63 : i32
    %162 = arith.index_cast %161 : i32 to index
    %163 = memref.load %arg1[%162] : memref<80xi32, #tpu.memory_space<smem>>
    %164 = arith.index_cast %163 : i32 to index
    %c0_64 = arith.constant 0 : index
    %c0_65 = arith.constant 0 : index
    %165 = vector.load %arg3[%164, %c0_64, %c0_65] : memref<32x1x256xf32, #tpu.memory_space<vmem>>, vector<1x1x256xf32>
    %166 = vector.shape_cast %165 : vector<1x1x256xf32> to vector<1x256xf32>
    %c1_i32_66 = arith.constant 1 : i32
    %167 = vector.broadcast %c1_i32_66 : i32 to vector<8x1xi32>
    %168 = arith.cmpi eq, %5, %167 : vector<8x1xi32>
    %cst_67 = arith.constant 0.000000e+00 : f32
    %169 = vector.shape_cast %168 : vector<8x1xi1> to vector<8x1xi1>
    %170 = vector.broadcast %169 : vector<8x1xi1> to vector<8x256xi1>
    %171 = vector.shape_cast %166 : vector<1x256xf32> to vector<1x256xf32>
    %172 = vector.broadcast %171 : vector<1x256xf32> to vector<8x256xf32>
    %173 = vector.broadcast %cst_67 : f32 to vector<8x256xf32>
    %174 = arith.select %170, %172, %173 : vector<8x256xi1>, vector<8x256xf32>
    %175 = arith.addf %160, %174 : vector<8x256xf32>
    %cst_68 = arith.constant dense<0.000000e+00> : vector<8x256xf32>
    %176 = tpu.matmul %141, %3, %cst_68 {dimension_numbers = #tpu.dot_dimension_numbers<[1], [0], [0], [1], [0, 0, 1, 1], [], []>} : vector<8x256xf32>, vector<256x256xf32>, vector<8x256xf32> -> vector<8x256xf32>
    %177 = arith.addf %175, %176 : vector<8x256xf32>
    %178 = vector.broadcast %4 : vector<1x256xf32> to vector<8x256xf32>
    %179 = arith.addf %177, %178 : vector<8x256xf32>
    %180 = math.tanh %179 : vector<8x256xf32>
    %181 = arith.index_cast %c3_i32 : i32 to index
    %c0_69 = arith.constant 0 : index
    %c0_70 = arith.constant 0 : index
    %182 = vector.load %arg6[%181, %c0_69, %c0_70] : memref<8x8x256xf32, #tpu.memory_space<vmem>>, vector<1x8x256xf32>
    %183 = vector.shape_cast %182 : vector<1x8x256xf32> to vector<8x256xf32>
    %184 = vector.shape_cast %180 : vector<8x256xf32> to vector<1x8x256xf32>
    tpu.vector_store %arg6[%181, %c0_69, %c0_70], %184 {strides = array<i32>} : memref<8x8x256xf32, #tpu.memory_space<vmem>>, vector<1x8x256xf32>,
    %c35_i32_71 = arith.constant 35 : i32
    %185 = arith.cmpi slt, %143, %c35_i32_71 : i32
    %186 = arith.select %185, %180, %141 : vector<8x256xf32>
    %c4_i32 = arith.constant 4 : i32
    %c8_i32_72 = arith.constant 8 : i32
    %187 = arith.muli %arg0, %c8_i32_72 : i32
    %188 = arith.addi %187, %c4_i32 : i32
    %c2_i32_73 = arith.constant 2 : i32
    %189 = arith.muli %188, %c2_i32_73 : i32
    %cst_74 = arith.constant 0.000000e+00 : f32
    %190 = vector.broadcast %cst_74 : f32 to vector<8x256xf32>
    %c0_i32_75 = arith.constant 0 : i32
    %191 = arith.addi %189, %c0_i32_75 : i32
    %192 = arith.index_cast %191 : i32 to index
    %193 = memref.load %arg1[%192] : memref<80xi32, #tpu.memory_space<smem>>
    %194 = arith.index_cast %193 : i32 to index
    %c0_76 = arith.constant 0 : index
    %c0_77 = arith.constant 0 : index
    %195 = vector.load %arg3[%194, %c0_76, %c0_77] : memref<32x1x256xf32, #tpu.memory_space<vmem>>, vector<1x1x256xf32>
    %196 = vector.shape_cast %195 : vector<1x1x256xf32> to vector<1x256xf32>
    %c0_i32_78 = arith.constant 0 : i32
    %197 = vector.broadcast %c0_i32_78 : i32 to vector<8x1xi32>
    %198 = arith.cmpi eq, %5, %197 : vector<8x1xi32>
    %cst_79 = arith.constant 0.000000e+00 : f32
    %199 = vector.shape_cast %198 : vector<8x1xi1> to vector<8x1xi1>
    %200 = vector.broadcast %199 : vector<8x1xi1> to vector<8x256xi1>
    %201 = vector.shape_cast %196 : vector<1x256xf32> to vector<1x256xf32>
    %202 = vector.broadcast %201 : vector<1x256xf32> to vector<8x256xf32>
    %203 = vector.broadcast %cst_79 : f32 to vector<8x256xf32>
    %204 = arith.select %200, %202, %203 : vector<8x256xi1>, vector<8x256xf32>
    %205 = arith.addf %190, %204 : vector<8x256xf32>
    %c1_i32_80 = arith.constant 1 : i32
    %206 = arith.addi %189, %c1_i32_80 : i32
    %207 = arith.index_cast %206 : i32 to index
    %208 = memref.load %arg1[%207] : memref<80xi32, #tpu.memory_space<smem>>
    %209 = arith.index_cast %208 : i32 to index
    %c0_81 = arith.constant 0 : index
    %c0_82 = arith.constant 0 : index
    %210 = vector.load %arg3[%209, %c0_81, %c0_82] : memref<32x1x256xf32, #tpu.memory_space<vmem>>, vector<1x1x256xf32>
    %211 = vector.shape_cast %210 : vector<1x1x256xf32> to vector<1x256xf32>
    %c1_i32_83 = arith.constant 1 : i32
    %212 = vector.broadcast %c1_i32_83 : i32 to vector<8x1xi32>
    %213 = arith.cmpi eq, %5, %212 : vector<8x1xi32>
    %cst_84 = arith.constant 0.000000e+00 : f32
    %214 = vector.shape_cast %213 : vector<8x1xi1> to vector<8x1xi1>
    %215 = vector.broadcast %214 : vector<8x1xi1> to vector<8x256xi1>
    %216 = vector.shape_cast %211 : vector<1x256xf32> to vector<1x256xf32>
    %217 = vector.broadcast %216 : vector<1x256xf32> to vector<8x256xf32>
    %218 = vector.broadcast %cst_84 : f32 to vector<8x256xf32>
    %219 = arith.select %215, %217, %218 : vector<8x256xi1>, vector<8x256xf32>
    %220 = arith.addf %205, %219 : vector<8x256xf32>
    %cst_85 = arith.constant dense<0.000000e+00> : vector<8x256xf32>
    %221 = tpu.matmul %186, %3, %cst_85 {dimension_numbers = #tpu.dot_dimension_numbers<[1], [0], [0], [1], [0, 0, 1, 1], [], []>} : vector<8x256xf32>, vector<256x256xf32>, vector<8x256xf32> -> vector<8x256xf32>
    %222 = arith.addf %220, %221 : vector<8x256xf32>
    %223 = vector.broadcast %4 : vector<1x256xf32> to vector<8x256xf32>
    %224 = arith.addf %222, %223 : vector<8x256xf32>
    %225 = math.tanh %224 : vector<8x256xf32>
    %226 = arith.index_cast %c4_i32 : i32 to index
    %c0_86 = arith.constant 0 : index
    %c0_87 = arith.constant 0 : index
    %227 = vector.load %arg6[%226, %c0_86, %c0_87] : memref<8x8x256xf32, #tpu.memory_space<vmem>>, vector<1x8x256xf32>
    %228 = vector.shape_cast %227 : vector<1x8x256xf32> to vector<8x256xf32>
    %229 = vector.shape_cast %225 : vector<8x256xf32> to vector<1x8x256xf32>
    tpu.vector_store %arg6[%226, %c0_86, %c0_87], %229 {strides = array<i32>} : memref<8x8x256xf32, #tpu.memory_space<vmem>>, vector<1x8x256xf32>,
    %c35_i32_88 = arith.constant 35 : i32
    %230 = arith.cmpi slt, %188, %c35_i32_88 : i32
    %231 = arith.select %230, %225, %186 : vector<8x256xf32>
    %c5_i32 = arith.constant 5 : i32
    %c8_i32_89 = arith.constant 8 : i32
    %232 = arith.muli %arg0, %c8_i32_89 : i32
    %233 = arith.addi %232, %c5_i32 : i32
    %c2_i32_90 = arith.constant 2 : i32
    %234 = arith.muli %233, %c2_i32_90 : i32
    %cst_91 = arith.constant 0.000000e+00 : f32
    %235 = vector.broadcast %cst_91 : f32 to vector<8x256xf32>
    %c0_i32_92 = arith.constant 0 : i32
    %236 = arith.addi %234, %c0_i32_92 : i32
    %237 = arith.index_cast %236 : i32 to index
    %238 = memref.load %arg1[%237] : memref<80xi32, #tpu.memory_space<smem>>
    %239 = arith.index_cast %238 : i32 to index
    %c0_93 = arith.constant 0 : index
    %c0_94 = arith.constant 0 : index
    %240 = vector.load %arg3[%239, %c0_93, %c0_94] : memref<32x1x256xf32, #tpu.memory_space<vmem>>, vector<1x1x256xf32>
    %241 = vector.shape_cast %240 : vector<1x1x256xf32> to vector<1x256xf32>
    %c0_i32_95 = arith.constant 0 : i32
    %242 = vector.broadcast %c0_i32_95 : i32 to vector<8x1xi32>
    %243 = arith.cmpi eq, %5, %242 : vector<8x1xi32>
    %cst_96 = arith.constant 0.000000e+00 : f32
    %244 = vector.shape_cast %243 : vector<8x1xi1> to vector<8x1xi1>
    %245 = vector.broadcast %244 : vector<8x1xi1> to vector<8x256xi1>
    %246 = vector.shape_cast %241 : vector<1x256xf32> to vector<1x256xf32>
    %247 = vector.broadcast %246 : vector<1x256xf32> to vector<8x256xf32>
    %248 = vector.broadcast %cst_96 : f32 to vector<8x256xf32>
    %249 = arith.select %245, %247, %248 : vector<8x256xi1>, vector<8x256xf32>
    %250 = arith.addf %235, %249 : vector<8x256xf32>
    %c1_i32_97 = arith.constant 1 : i32
    %251 = arith.addi %234, %c1_i32_97 : i32
    %252 = arith.index_cast %251 : i32 to index
    %253 = memref.load %arg1[%252] : memref<80xi32, #tpu.memory_space<smem>>
    %254 = arith.index_cast %253 : i32 to index
    %c0_98 = arith.constant 0 : index
    %c0_99 = arith.constant 0 : index
    %255 = vector.load %arg3[%254, %c0_98, %c0_99] : memref<32x1x256xf32, #tpu.memory_space<vmem>>, vector<1x1x256xf32>
    %256 = vector.shape_cast %255 : vector<1x1x256xf32> to vector<1x256xf32>
    %c1_i32_100 = arith.constant 1 : i32
    %257 = vector.broadcast %c1_i32_100 : i32 to vector<8x1xi32>
    %258 = arith.cmpi eq, %5, %257 : vector<8x1xi32>
    %cst_101 = arith.constant 0.000000e+00 : f32
    %259 = vector.shape_cast %258 : vector<8x1xi1> to vector<8x1xi1>
    %260 = vector.broadcast %259 : vector<8x1xi1> to vector<8x256xi1>
    %261 = vector.shape_cast %256 : vector<1x256xf32> to vector<1x256xf32>
    %262 = vector.broadcast %261 : vector<1x256xf32> to vector<8x256xf32>
    %263 = vector.broadcast %cst_101 : f32 to vector<8x256xf32>
    %264 = arith.select %260, %262, %263 : vector<8x256xi1>, vector<8x256xf32>
    %265 = arith.addf %250, %264 : vector<8x256xf32>
    %cst_102 = arith.constant dense<0.000000e+00> : vector<8x256xf32>
    %266 = tpu.matmul %231, %3, %cst_102 {dimension_numbers = #tpu.dot_dimension_numbers<[1], [0], [0], [1], [0, 0, 1, 1], [], []>} : vector<8x256xf32>, vector<256x256xf32>, vector<8x256xf32> -> vector<8x256xf32>
    %267 = arith.addf %265, %266 : vector<8x256xf32>
    %268 = vector.broadcast %4 : vector<1x256xf32> to vector<8x256xf32>
    %269 = arith.addf %267, %268 : vector<8x256xf32>
    %270 = math.tanh %269 : vector<8x256xf32>
    %271 = arith.index_cast %c5_i32 : i32 to index
    %c0_103 = arith.constant 0 : index
    %c0_104 = arith.constant 0 : index
    %272 = vector.load %arg6[%271, %c0_103, %c0_104] : memref<8x8x256xf32, #tpu.memory_space<vmem>>, vector<1x8x256xf32>
    %273 = vector.shape_cast %272 : vector<1x8x256xf32> to vector<8x256xf32>
    %274 = vector.shape_cast %270 : vector<8x256xf32> to vector<1x8x256xf32>
    tpu.vector_store %arg6[%271, %c0_103, %c0_104], %274 {strides = array<i32>} : memref<8x8x256xf32, #tpu.memory_space<vmem>>, vector<1x8x256xf32>,
    %c35_i32_105 = arith.constant 35 : i32
    %275 = arith.cmpi slt, %233, %c35_i32_105 : i32
    %276 = arith.select %275, %270, %231 : vector<8x256xf32>
    %c6_i32 = arith.constant 6 : i32
    %c8_i32_106 = arith.constant 8 : i32
    %277 = arith.muli %arg0, %c8_i32_106 : i32
    %278 = arith.addi %277, %c6_i32 : i32
    %c2_i32_107 = arith.constant 2 : i32
    %279 = arith.muli %278, %c2_i32_107 : i32
    %cst_108 = arith.constant 0.000000e+00 : f32
    %280 = vector.broadcast %cst_108 : f32 to vector<8x256xf32>
    %c0_i32_109 = arith.constant 0 : i32
    %281 = arith.addi %279, %c0_i32_109 : i32
    %282 = arith.index_cast %281 : i32 to index
    %283 = memref.load %arg1[%282] : memref<80xi32, #tpu.memory_space<smem>>
    %284 = arith.index_cast %283 : i32 to index
    %c0_110 = arith.constant 0 : index
    %c0_111 = arith.constant 0 : index
    %285 = vector.load %arg3[%284, %c0_110, %c0_111] : memref<32x1x256xf32, #tpu.memory_space<vmem>>, vector<1x1x256xf32>
    %286 = vector.shape_cast %285 : vector<1x1x256xf32> to vector<1x256xf32>
    %c0_i32_112 = arith.constant 0 : i32
    %287 = vector.broadcast %c0_i32_112 : i32 to vector<8x1xi32>
    %288 = arith.cmpi eq, %5, %287 : vector<8x1xi32>
    %cst_113 = arith.constant 0.000000e+00 : f32
    %289 = vector.shape_cast %288 : vector<8x1xi1> to vector<8x1xi1>
    %290 = vector.broadcast %289 : vector<8x1xi1> to vector<8x256xi1>
    %291 = vector.shape_cast %286 : vector<1x256xf32> to vector<1x256xf32>
    %292 = vector.broadcast %291 : vector<1x256xf32> to vector<8x256xf32>
    %293 = vector.broadcast %cst_113 : f32 to vector<8x256xf32>
    %294 = arith.select %290, %292, %293 : vector<8x256xi1>, vector<8x256xf32>
    %295 = arith.addf %280, %294 : vector<8x256xf32>
    %c1_i32_114 = arith.constant 1 : i32
    %296 = arith.addi %279, %c1_i32_114 : i32
    %297 = arith.index_cast %296 : i32 to index
    %298 = memref.load %arg1[%297] : memref<80xi32, #tpu.memory_space<smem>>
    %299 = arith.index_cast %298 : i32 to index
    %c0_115 = arith.constant 0 : index
    %c0_116 = arith.constant 0 : index
    %300 = vector.load %arg3[%299, %c0_115, %c0_116] : memref<32x1x256xf32, #tpu.memory_space<vmem>>, vector<1x1x256xf32>
    %301 = vector.shape_cast %300 : vector<1x1x256xf32> to vector<1x256xf32>
    %c1_i32_117 = arith.constant 1 : i32
    %302 = vector.broadcast %c1_i32_117 : i32 to vector<8x1xi32>
    %303 = arith.cmpi eq, %5, %302 : vector<8x1xi32>
    %cst_118 = arith.constant 0.000000e+00 : f32
    %304 = vector.shape_cast %303 : vector<8x1xi1> to vector<8x1xi1>
    %305 = vector.broadcast %304 : vector<8x1xi1> to vector<8x256xi1>
    %306 = vector.shape_cast %301 : vector<1x256xf32> to vector<1x256xf32>
    %307 = vector.broadcast %306 : vector<1x256xf32> to vector<8x256xf32>
    %308 = vector.broadcast %cst_118 : f32 to vector<8x256xf32>
    %309 = arith.select %305, %307, %308 : vector<8x256xi1>, vector<8x256xf32>
    %310 = arith.addf %295, %309 : vector<8x256xf32>
    %cst_119 = arith.constant dense<0.000000e+00> : vector<8x256xf32>
    %311 = tpu.matmul %276, %3, %cst_119 {dimension_numbers = #tpu.dot_dimension_numbers<[1], [0], [0], [1], [0, 0, 1, 1], [], []>} : vector<8x256xf32>, vector<256x256xf32>, vector<8x256xf32> -> vector<8x256xf32>
    %312 = arith.addf %310, %311 : vector<8x256xf32>
    %313 = vector.broadcast %4 : vector<1x256xf32> to vector<8x256xf32>
    %314 = arith.addf %312, %313 : vector<8x256xf32>
    %315 = math.tanh %314 : vector<8x256xf32>
    %316 = arith.index_cast %c6_i32 : i32 to index
    %c0_120 = arith.constant 0 : index
    %c0_121 = arith.constant 0 : index
    %317 = vector.load %arg6[%316, %c0_120, %c0_121] : memref<8x8x256xf32, #tpu.memory_space<vmem>>, vector<1x8x256xf32>
    %318 = vector.shape_cast %317 : vector<1x8x256xf32> to vector<8x256xf32>
    %319 = vector.shape_cast %315 : vector<8x256xf32> to vector<1x8x256xf32>
    tpu.vector_store %arg6[%316, %c0_120, %c0_121], %319 {strides = array<i32>} : memref<8x8x256xf32, #tpu.memory_space<vmem>>, vector<1x8x256xf32>,
    %c35_i32_122 = arith.constant 35 : i32
    %320 = arith.cmpi slt, %278, %c35_i32_122 : i32
    %321 = arith.select %320, %315, %276 : vector<8x256xf32>
    %c7_i32 = arith.constant 7 : i32
    %c8_i32_123 = arith.constant 8 : i32
    %322 = arith.muli %arg0, %c8_i32_123 : i32
    %323 = arith.addi %322, %c7_i32 : i32
    %c2_i32_124 = arith.constant 2 : i32
    %324 = arith.muli %323, %c2_i32_124 : i32
    %cst_125 = arith.constant 0.000000e+00 : f32
    %325 = vector.broadcast %cst_125 : f32 to vector<8x256xf32>
    %c0_i32_126 = arith.constant 0 : i32
    %326 = arith.addi %324, %c0_i32_126 : i32
    %327 = arith.index_cast %326 : i32 to index
    %328 = memref.load %arg1[%327] : memref<80xi32, #tpu.memory_space<smem>>
    %329 = arith.index_cast %328 : i32 to index
    %c0_127 = arith.constant 0 : index
    %c0_128 = arith.constant 0 : index
    %330 = vector.load %arg3[%329, %c0_127, %c0_128] : memref<32x1x256xf32, #tpu.memory_space<vmem>>, vector<1x1x256xf32>
    %331 = vector.shape_cast %330 : vector<1x1x256xf32> to vector<1x256xf32>
    %c0_i32_129 = arith.constant 0 : i32
    %332 = vector.broadcast %c0_i32_129 : i32 to vector<8x1xi32>
    %333 = arith.cmpi eq, %5, %332 : vector<8x1xi32>
    %cst_130 = arith.constant 0.000000e+00 : f32
    %334 = vector.shape_cast %333 : vector<8x1xi1> to vector<8x1xi1>
    %335 = vector.broadcast %334 : vector<8x1xi1> to vector<8x256xi1>
    %336 = vector.shape_cast %331 : vector<1x256xf32> to vector<1x256xf32>
    %337 = vector.broadcast %336 : vector<1x256xf32> to vector<8x256xf32>
    %338 = vector.broadcast %cst_130 : f32 to vector<8x256xf32>
    %339 = arith.select %335, %337, %338 : vector<8x256xi1>, vector<8x256xf32>
    %340 = arith.addf %325, %339 : vector<8x256xf32>
    %c1_i32_131 = arith.constant 1 : i32
    %341 = arith.addi %324, %c1_i32_131 : i32
    %342 = arith.index_cast %341 : i32 to index
    %343 = memref.load %arg1[%342] : memref<80xi32, #tpu.memory_space<smem>>
    %344 = arith.index_cast %343 : i32 to index
    %c0_132 = arith.constant 0 : index
    %c0_133 = arith.constant 0 : index
    %345 = vector.load %arg3[%344, %c0_132, %c0_133] : memref<32x1x256xf32, #tpu.memory_space<vmem>>, vector<1x1x256xf32>
    %346 = vector.shape_cast %345 : vector<1x1x256xf32> to vector<1x256xf32>
    %c1_i32_134 = arith.constant 1 : i32
    %347 = vector.broadcast %c1_i32_134 : i32 to vector<8x1xi32>
    %348 = arith.cmpi eq, %5, %347 : vector<8x1xi32>
    %cst_135 = arith.constant 0.000000e+00 : f32
    %349 = vector.shape_cast %348 : vector<8x1xi1> to vector<8x1xi1>
    %350 = vector.broadcast %349 : vector<8x1xi1> to vector<8x256xi1>
    %351 = vector.shape_cast %346 : vector<1x256xf32> to vector<1x256xf32>
    %352 = vector.broadcast %351 : vector<1x256xf32> to vector<8x256xf32>
    %353 = vector.broadcast %cst_135 : f32 to vector<8x256xf32>
    %354 = arith.select %350, %352, %353 : vector<8x256xi1>, vector<8x256xf32>
    %355 = arith.addf %340, %354 : vector<8x256xf32>
    %cst_136 = arith.constant dense<0.000000e+00> : vector<8x256xf32>
    %356 = tpu.matmul %321, %3, %cst_136 {dimension_numbers = #tpu.dot_dimension_numbers<[1], [0], [0], [1], [0, 0, 1, 1], [], []>} : vector<8x256xf32>, vector<256x256xf32>, vector<8x256xf32> -> vector<8x256xf32>
    %357 = arith.addf %355, %356 : vector<8x256xf32>
    %358 = vector.broadcast %4 : vector<1x256xf32> to vector<8x256xf32>
    %359 = arith.addf %357, %358 : vector<8x256xf32>
    %360 = math.tanh %359 : vector<8x256xf32>
    %361 = arith.index_cast %c7_i32 : i32 to index
    %c0_137 = arith.constant 0 : index
    %c0_138 = arith.constant 0 : index
    %362 = vector.load %arg6[%361, %c0_137, %c0_138] : memref<8x8x256xf32, #tpu.memory_space<vmem>>, vector<1x8x256xf32>
    %363 = vector.shape_cast %362 : vector<1x8x256xf32> to vector<8x256xf32>
    %364 = vector.shape_cast %360 : vector<8x256xf32> to vector<1x8x256xf32>
    tpu.vector_store %arg6[%361, %c0_137, %c0_138], %364 {strides = array<i32>} : memref<8x8x256xf32, #tpu.memory_space<vmem>>, vector<1x8x256xf32>,
    %c35_i32_139 = arith.constant 35 : i32
    %365 = arith.cmpi slt, %323, %c35_i32_139 : i32
    %366 = arith.select %365, %360, %321 : vector<8x256xf32>
    %c8_i32_140 = arith.constant 8 : i32
    %c0_141 = arith.constant 0 : index
    %c0_142 = arith.constant 0 : index
    %367 = vector.load %arg8[%c0_141, %c0_142] : memref<8x256xf32, #tpu.memory_space<vmem>>, vector<8x256xf32>
    tpu.vector_store %arg8[%c0_141, %c0_142], %366 {strides = array<i32>} : memref<8x256xf32, #tpu.memory_space<vmem>>, vector<8x256xf32>,
    %c4_i32_143 = arith.constant 4 : i32
    %368 = arith.cmpi eq, %arg0, %c4_i32_143 : i32
    %369 = arith.extui %368 : i1 to i32
    %c0_i32_144 = arith.constant 0 : i32
    %370 = arith.cmpi ne, %369, %c0_i32_144 : i32
    scf.if %370 {
      %c0_145 = arith.constant 0 : index
      %c0_146 = arith.constant 0 : index
      %371 = vector.load %arg7[%c0_145, %c0_146] : memref<8x256xf32, #tpu.memory_space<vmem>>, vector<8x256xf32>
      tpu.vector_store %arg7[%c0_145, %c0_146], %366 {strides = array<i32>} : memref<8x256xf32, #tpu.memory_space<vmem>>, vector<8x256xf32>,
    } else {
    }
    return
  }
  func.func @transform_0(%arg0: i32, %arg1: memref<80xi32, #tpu.memory_space<smem>>) -> (i32, i32) {
    %c0_i32 = arith.constant 0 : i32
    %c0_i32_0 = arith.constant 0 : i32
    %c0_i32_1 = arith.constant 0 : i32
    return %c0_i32, %c0_i32_0 : i32, i32
  }
  func.func @transform_1(%arg0: i32, %arg1: memref<80xi32, #tpu.memory_space<smem>>) -> (i32, i32, i32) {
    %c0_i32 = arith.constant 0 : i32
    %c0_i32_0 = arith.constant 0 : i32
    %c0_i32_1 = arith.constant 0 : i32
    %c0_i32_2 = arith.constant 0 : i32
    return %c0_i32, %c0_i32_0, %c0_i32_1 : i32, i32, i32
  }
  func.func @transform_2(%arg0: i32, %arg1: memref<80xi32, #tpu.memory_space<smem>>) -> (i32, i32) {
    %c0_i32 = arith.constant 0 : i32
    %c0_i32_0 = arith.constant 0 : i32
    %c0_i32_1 = arith.constant 0 : i32
    return %c0_i32, %c0_i32_0 : i32, i32
  }
  func.func @transform_3(%arg0: i32, %arg1: memref<80xi32, #tpu.memory_space<smem>>) -> (i32, i32) {
    %c0_i32 = arith.constant 0 : i32
    %c0_i32_0 = arith.constant 0 : i32
    %c0_i32_1 = arith.constant 0 : i32
    return %c0_i32, %c0_i32_0 : i32, i32
  }
  func.func @transform_4(%arg0: i32, %arg1: memref<80xi32, #tpu.memory_space<smem>>) -> (i32, i32, i32) {
    %c0_i32 = arith.constant 0 : i32
    %c0_i32_0 = arith.constant 0 : i32
    %c0_i32_1 = arith.constant 0 : i32
    return %arg0, %c0_i32, %c0_i32_0 : i32, i32, i32
  }
  func.func @transform_5(%arg0: i32, %arg1: memref<80xi32, #tpu.memory_space<smem>>) -> (i32, i32) {
    %c0_i32 = arith.constant 0 : i32
    %c0_i32_0 = arith.constant 0 : i32
    %c0_i32_1 = arith.constant 0 : i32
    return %c0_i32, %c0_i32_0 : i32, i32
  }
}

</mosaic_0001>

<llo_original>
// kernel: tpu_custom_call.1
$region0: #{tpu_custom_call.1}
  #allocation0 [shape = 'u32[]', space=smem, size = 0x4, offset = 0x4, fixed_abs, tag = 'smem constant byte address 0x4 - core index']
  #allocation1 [shape = 'u32[144,128]{1,0:T(1,128)}', space=vmem, size = 0x12000, scoped, tag = 'internal scratch']
  #allocation2 [shape = 'f32[8,256]{1,0:T(8,128)}', space=vmem, size = 0x2000, scoped, tag = 'scratch operand']
  #allocation3 [shape = 's32[1]{0}', space=sflag, size = 0x4, scoped, tag = 'scoped memory for tpu_custom_call.1']
  #allocation4 [shape = 'u8[512]{0}', space=smem, size = 0x200, scoped, tag = 'prefetched SMEM operand 0']
  %s0 = inlined_call_operand.hbm [shape: s32[80], index: 0, kind: input, shape index: {}]
  %s1 = inlined_call_operand.hbm [shape: f32[8,256], index: 1, kind: input, shape index: {}]
  %s2 = inlined_call_operand.hbm [shape: f32[32,1,256], index: 2, kind: input, shape index: {}]
  %s3 = inlined_call_operand.hbm [shape: f32[256,256], index: 3, kind: input, shape index: {}]
  %s4 = inlined_call_operand.vmem [shape: f32[1,256], index: 4, kind: input, shape index: {}]
  %s5 = inlined_call_operand.hbm [shape: f32[40,8,256], index: 5, kind: output, shape index: {0}]
  %s6 = inlined_call_operand.hbm [shape: f32[8,256], index: 6, kind: output, shape index: {1}]
  %7 = xla_tuple %s5, %s6
  %s8 = sld [smem:[#allocation0]]
  $region77: #{tpu_custom_call.1} parent=0
    _
  %s10 = ssub.s32 1, %s8
  %s11 = scalar_select 0, %s10, %s8
  %13 = dma.hbm_to_smem %s0, 16, [#allocation4], [#allocation3]
  %14 = dma.done [#allocation3], 16
  %15 = sfence
  $region1: #{tpu_custom_call.1} parent=0
    #allocation5 [shape = 'u8[8192]{0}', space=vmem, size = 0x2000, scoped, tag = 'input window, operand 1, single buffered']
    #allocation6 [shape = 's32[2]{0}', space=sflag, size = 0x8, scoped, tag = 'scoped memory for tpu_custom_call.1']
    #allocation7 [shape = 's32[2]{0}', space=sflag, size = 0x8, scoped, tag = 'scoped memory for tpu_custom_call.1']
    #allocation8 [shape = 'u8[32768]{0}', space=vmem, size = 0x8000, scoped, tag = 'input window, operand 2, single buffered']
    #allocation9 [shape = 's32[1]{0}', space=sflag, size = 0x4, scoped, tag = 'scoped memory for tpu_custom_call.1']
    #allocation10 [shape = 'u8[262144]{0}', space=vmem, size = 0x40000, scoped, tag = 'input window, operand 3, single buffered']
    #allocation11 [shape = 'u8[131072]{0}', space=vmem, size = 0x20000, scoped, tag = 'output window, operand 0']
    #allocation12 [shape = 'u8[8192]{0}', space=vmem, size = 0x2000, scoped, tag = 'output window, operand 1, single buffered']
    #allocation13 [shape = 's32[1]{0}', space=sflag, size = 0x4, scoped, tag = 'scoped memory for tpu_custom_call.1']
    %16 = vsyncpa [#allocation6], 0
    %17 = vsyncpa [#allocation9], 0
    %18 = vsyncpa [#allocation7], 0
    %s19 = scalar_lea.sflag [#allocation7], 1
    %20 = vsyncpa %s19, 0
    %21 = vsyncpa [#allocation13], 0
    loop: start=0, step=1, limit=7
    $region2: #{tpu_custom_call.1} parent=1 // loop_pre_header
      _
    $region3: #{tpu_custom_call.1} parent=1 // loop_header
      %s23 = sphi 0, %s27
      %p24 = scmp.ge.s32.totalorder %s23, 7
      %s31 = sphi 0, %s31
      %s33 = sphi 0, %s31
      %s34 = sphi 0, %s33
      %s48 = sphi 0, %s34
      %s52 = sphi 0, %s52
      %s54 = sphi 0, %s52
      %s55 = sphi 0, %s54
      %s69 = sphi 0, %s55
      %s73 = sphi 0, %s73
      %s75 = sphi 0, %s73
      %s76 = sphi 0, %s75
      %s90 = sphi 0, %s76
      %s94 = sphi 0, %s94
      %s96 = sphi 0, %s94
      %s97 = sphi 0, %s96
      %s111 = sphi 0, %s97
      %s117 = sphi 0, %s119
      %s120 = sphi 0, %s117
      %s121 = sphi 0, %s120
      %s137 = sphi 0, %s121
      %s141 = sphi 0, %s141
      %s143 = sphi 0, %s141
      %s144 = sphi 0, %s143
      %s158 = sphi 0, %s144
    $region4: #{tpu_custom_call.1} parent=1 // loop_header_branch
      %26 = sbr.rel (%p24) target = $region8
    $region5: #{tpu_custom_call.1} parent=1 // loop_body
      %s28 = ssub.s32 %s23, 1
      %s29 = ssub.s32 %s23, 2
      %s30 = sadd.s32 %s23, 1
      %s32 = sadd.s32 %s31, 1
      %p35 = scmp.eq.s32.totalorder %s23, 4
      %p36 = scmp.ne.s32.totalorder %s31, %s33
      %p37 = scmp.eq.s32.totalorder %s23, 0
      %p38 = por %p36, %p37
      %p39 = scmp.ne.s32.totalorder %s31, %s33
      %p40 = scmp.eq.s32.totalorder %s28, 4
      %p41 = por %p39, %p40
      %p42 = scmp.ne.s32.totalorder %s33, %s34
      %p43 = scmp.eq.s32.totalorder %s28, 0
      %p44 = por %p42, %p43
      %p45 = scmp.ne.s32.totalorder %s33, %s34
      %p46 = scmp.eq.s32.totalorder %s29, 4
      %p47 = por %p45, %p46
      %p49 = scmp.ne.s32.totalorder %s34, %s48
      %p50 = scmp.eq.s32.totalorder %s29, 0
      %p51 = por %p49, %p50
      %s53 = sadd.s32 %s52, 1
      %p56 = scmp.eq.s32.totalorder %s23, 4
      %p57 = scmp.ne.s32.totalorder %s52, %s54
      %p58 = scmp.eq.s32.totalorder %s23, 0
      %p59 = por %p57, %p58
      %p60 = scmp.ne.s32.totalorder %s52, %s54
      %p61 = scmp.eq.s32.totalorder %s28, 4
      %p62 = por %p60, %p61
      %p63 = scmp.ne.s32.totalorder %s54, %s55
      %p64 = scmp.eq.s32.totalorder %s28, 0
      %p65 = por %p63, %p64
      %p66 = scmp.ne.s32.totalorder %s54, %s55
      %p67 = scmp.eq.s32.totalorder %s29, 4
      %p68 = por %p66, %p67
      %p70 = scmp.ne.s32.totalorder %s55, %s69
      %p71 = scmp.eq.s32.totalorder %s29, 0
      %p72 = por %p70, %p71
      %s74 = sadd.s32 %s73, 1
      %p77 = scmp.eq.s32.totalorder %s23, 4
      %p78 = scmp.ne.s32.totalorder %s73, %s75
      %p79 = scmp.eq.s32.totalorder %s23, 0
      %p80 = por %p78, %p79
      %p81 = scmp.ne.s32.totalorder %s73, %s75
      %p82 = scmp.eq.s32.totalorder %s28, 4
      %p83 = por %p81, %p82
      %p84 = scmp.ne.s32.totalorder %s75, %s76
      %p85 = scmp.eq.s32.totalorder %s28, 0
      %p86 = por %p84, %p85
      %p87 = scmp.ne.s32.totalorder %s75, %s76
      %p88 = scmp.eq.s32.totalorder %s29, 4
      %p89 = por %p87, %p88
      %p91 = scmp.ne.s32.totalorder %s76, %s90
      %p92 = scmp.eq.s32.totalorder %s29, 0
      %p93 = por %p91, %p92
      %s95 = sadd.s32 %s94, 1
      %p98 = scmp.eq.s32.totalorder %s23, 4
      %p99 = scmp.ne.s32.totalorder %s94, %s96
      %p100 = scmp.eq.s32.totalorder %s23, 0
      %p101 = por %p99, %p100
      %p102 = scmp.ne.s32.totalorder %s94, %s96
      %p103 = scmp.eq.s32.totalorder %s28, 4
      %p104 = por %p102, %p103
      %p105 = scmp.ne.s32.totalorder %s96, %s97
      %p106 = scmp.eq.s32.totalorder %s28, 0
      %p107 = por %p105, %p106
      %p108 = scmp.ne.s32.totalorder %s96, %s97
      %p109 = scmp.eq.s32.totalorder %s29, 4
      %p110 = por %p108, %p109
      %p112 = scmp.ne.s32.totalorder %s97, %s111
      %p113 = scmp.eq.s32.totalorder %s29, 0
      %p114 = por %p112, %p113
      %s115 = ssub.s32 %s23, %s30
      %p116 = scmp.eq.s32.totalorder %s115, 0
      %s118 = sadd.s32 %s117, 1
      %s119 = scalar_select %p116, %s117, %s118
      %p122 = pneg %p116
      %p123 = scmp.eq.s32.totalorder %s23, 4
      %p124 = por %p122, %p123
      %p125 = scmp.ne.s32.totalorder %s117, %s120
      %p126 = scmp.eq.s32.totalorder %s23, 0
      %p127 = por %p125, %p126
      %p128 = scmp.ne.s32.totalorder %s117, %s120
      %p129 = scmp.eq.s32.totalorder %s28, 4
      %p130 = por %p128, %p129
      %p131 = scmp.ne.s32.totalorder %s120, %s121
      %p132 = scmp.eq.s32.totalorder %s28, 0
      %p133 = por %p131, %p132
      %p134 = scmp.ne.s32.totalorder %s120, %s121
      %p135 = scmp.eq.s32.totalorder %s29, 4
      %p136 = por %p134, %p135
      %p138 = scmp.ne.s32.totalorder %s121, %s137
      %p139 = scmp.eq.s32.totalorder %s29, 0
      %p140 = por %p138, %p139
      %s142 = sadd.s32 %s141, 1
      %p145 = scmp.eq.s32.totalorder %s23, 4
      %p146 = scmp.ne.s32.totalorder %s141, %s143
      %p147 = scmp.eq.s32.totalorder %s23, 0
      %p148 = por %p146, %p147
      %p149 = scmp.ne.s32.totalorder %s141, %s143
      %p150 = scmp.eq.s32.totalorder %s28, 4
      %p151 = por %p149, %p150
      %p152 = scmp.ne.s32.totalorder %s143, %s144
      %p153 = scmp.eq.s32.totalorder %s28, 0
      %p154 = por %p152, %p153
      %p155 = scmp.ne.s32.totalorder %s143, %s144
      %p156 = scmp.eq.s32.totalorder %s29, 4
      %p157 = por %p155, %p156
      %p159 = scmp.ne.s32.totalorder %s144, %s158
      %p160 = scmp.eq.s32.totalorder %s29, 0
      %p161 = por %p159, %p160
      %p162 = scmp.le.s32.totalorder 1, %s23
      %p163 = scmp.lt.s32.totalorder %s23, 6
      %p164 = pnand %p162, %p163
      %p165 = pneg %p164
      // Predicated region
      $region9: #{tpu_custom_call.1} parent=5 // pred_check
        _
      $region10: #{tpu_custom_call.1} parent=5 // pred_check_branch
        %167 = sbr.rel (%p164) target = $region12
      $region11: #{tpu_custom_call.1} parent=5 // pred_region
        %s168 = ssub.s32 %s23, 1
        // Predicated region
        $region13: #{tpu_custom_call.1} parent=11 // pred_check
          %p169 = pneg %p44
        $region14: #{tpu_custom_call.1} parent=11 // pred_check_branch
          %171 = sbr.rel (%p169) target = $region16
        $region15: #{tpu_custom_call.1} parent=11 // pred_region
          %s173 = ssub.s32 256, 256
          %174 = vsyncadd [#allocation6], %s173
          %s176 = sshll.u32 [#allocation5], 4
          %s177 = int_to_ptr.vmem [resolvable:$true] %s176
          %179 = dma.hbm_to_vmem [thread:$0]  %s1, 256, %s177, [#allocation6]
        $region16: #{tpu_custom_call.1} parent=11 // pred_fallthru
          _
        // Predicated region
        $region17: #{tpu_custom_call.1} parent=11 // pred_check
          %p180 = pneg %p65
        $region18: #{tpu_custom_call.1} parent=11 // pred_check_branch
          %182 = sbr.rel (%p180) target = $region20
        $region19: #{tpu_custom_call.1} parent=11 // pred_region
          %s184 = ssub.s32 1024, 1024
          %185 = vsyncadd [#allocation9], %s184
          %s186 = sshll.u32 [#allocation8], 4
          %s187 = int_to_ptr.vmem [resolvable:$true] %s186
          %192 = dma.hbm_to_vmem [thread:$0]  %s2, 1024, %s187, [#allocation9], 32, 32, 2
        $region20: #{tpu_custom_call.1} parent=11 // pred_fallthru
          _
        // Predicated region
        $region21: #{tpu_custom_call.1} parent=11 // pred_check
          %p193 = pneg %p86
        $region22: #{tpu_custom_call.1} parent=11 // pred_check_branch
          %195 = sbr.rel (%p193) target = $region24
        $region23: #{tpu_custom_call.1} parent=11 // pred_region
          %s197 = ssub.s32 8192, 8192
          %198 = vsyncadd [#allocation9], %s197
          %s199 = sshll.u32 [#allocation10], 4
          %s200 = int_to_ptr.vmem [resolvable:$true] %s199
          %205 = dma.hbm_to_vmem [thread:$0]  %s3, 8192, %s200, [#allocation9], 256, 256, 16
        $region24: #{tpu_custom_call.1} parent=11 // pred_fallthru
          _
        // Predicated region
        $region25: #{tpu_custom_call.1} parent=11 // pred_check
          %p206 = pneg %p107
        $region26: #{tpu_custom_call.1} parent=11 // pred_check_branch
          %208 = sbr.rel (%p206) target = $region28
        $region27: #{tpu_custom_call.1} parent=11 // pred_region
          _
        $region28: #{tpu_custom_call.1} parent=11 // pred_fallthru
          _
      $region12: #{tpu_custom_call.1} parent=5 // pred_fallthru
        _
      %p209 = scmp.lt.s32.totalorder %s23, 5
      // Predicated region
      $region29: #{tpu_custom_call.1} parent=5 // pred_check
        %p210 = pneg %p209
      $region30: #{tpu_custom_call.1} parent=5 // pred_check_branch
        %212 = sbr.rel (%p210) target = $region32
      $region31: #{tpu_custom_call.1} parent=5 // pred_region
        _
      $region32: #{tpu_custom_call.1} parent=5 // pred_fallthru
        _
      %p213 = scmp.le.s32.totalorder 1, %s23
      %p214 = scmp.lt.s32.totalorder %s23, 6
      %p215 = pnand %p213, %p214
      %p216 = pneg %p215
      // Predicated region
      $region33: #{tpu_custom_call.1} parent=5 // pred_check
        _
      $region34: #{tpu_custom_call.1} parent=5 // pred_check_branch
        %218 = sbr.rel (%p215) target = $region36
      $region35: #{tpu_custom_call.1} parent=5 // pred_region
        %s219 = ssub.s32 %s23, 1
        // Predicated region
        $region37: #{tpu_custom_call.1} parent=35 // pred_check
          %p220 = pneg %p44
        $region38: #{tpu_custom_call.1} parent=35 // pred_check_branch
          %222 = sbr.rel (%p220) target = $region40
        $region39: #{tpu_custom_call.1} parent=35 // pred_region
          %223 = dma.done [#allocation6], 256
        $region40: #{tpu_custom_call.1} parent=35 // pred_fallthru
          _
        // Predicated region
        $region41: #{tpu_custom_call.1} parent=35 // pred_check
          %p224 = pneg %p65
        $region42: #{tpu_custom_call.1} parent=35 // pred_check_branch
          %226 = sbr.rel (%p224) target = $region44
        $region43: #{tpu_custom_call.1} parent=35 // pred_region
          %227 = dma.done [#allocation9], 1024
        $region44: #{tpu_custom_call.1} parent=35 // pred_fallthru
          _
        // Predicated region
        $region45: #{tpu_custom_call.1} parent=35 // pred_check
          %p228 = pneg %p86
        $region46: #{tpu_custom_call.1} parent=35 // pred_check_branch
          %230 = sbr.rel (%p228) target = $region48
        $region47: #{tpu_custom_call.1} parent=35 // pred_region
          %231 = dma.done [#allocation9], 8192
        $region48: #{tpu_custom_call.1} parent=35 // pred_fallthru
          _
        %p232 = pneg %p44
        %p233 = pneg %p41
        %p234 = pneg %p65
        %p235 = pneg %p62
        %p236 = pneg %p86
        %p237 = pneg %p83
        %p238 = pneg %p107
        %p239 = pneg %p104
        %p240 = pneg %p133
        %p241 = pneg %p130
        %s242 = sand.u32 %s120, 1
        %s243 = scalar_lea.sflag [#allocation7], %s242
        %s244 = sand.u32 %s120, 1
        %s245 = smul.addr %s244, 128
        %s246 = scalar_lea.vmem [#allocation11], %s245
        %p247 = pneg %p154
        %p248 = pneg %p151
        %s249 = smul.u32 8, %s28
        %p250 = scmp.eq.s32.totalorder %s28, 0
        // Predicated region
        $region49: #{tpu_custom_call.1} parent=35 // pred_check
          %p251 = pneg %p250
        $region50: #{tpu_custom_call.1} parent=35 // pred_check_branch
          %253 = sbr.rel (%p251) target = $region52
        $region51: #{tpu_custom_call.1} parent=35 // pred_region
          %v254 = vld [vmem:[#allocation5] sm:$0xff]
          %v255 = vld [vmem:[#allocation5 + $0x8] sm:$0xff]
          %256 = vst [vmem:[#allocation2] sm:$0xff] %v254
          %257 = vst [vmem:[#allocation2 + $0x8] sm:$0xff] %v255
        $region52: #{tpu_custom_call.1} parent=35 // pred_fallthru
          _
        %v258 = vld [vmem:[#allocation10] sm:$0xff]
        %v259 = vld [vmem:[#allocation10 + $0x8] sm:$0xff]
        %v260 = vld [vmem:[#allocation10 + $0x10] sm:$0xff]
        %v261 = vld [vmem:[#allocation10 + $0x18] sm:$0xff]
        %v262 = vld [vmem:[#allocation10 + $0x20] sm:$0xff]
        %v263 = vld [vmem:[#allocation10 + $0x28] sm:$0xff]
        %v264 = vld [vmem:[#allocation10 + $0x30] sm:$0xff]
        %v265 = vld [vmem:[#allocation10 + $0x38] sm:$0xff]
        %v266 = vld [vmem:[#allocation10 + $0x40] sm:$0xff]
        %v267 = vld [vmem:[#allocation10 + $0x48] sm:$0xff]
        %v268 = vld [vmem:[#allocation10 + $0x50] sm:$0xff]
        %v269 = vld [vmem:[#allocation10 + $0x58] sm:$0xff]
        %v270 = vld [vmem:[#allocation10 + $0x60] sm:$0xff]
        %v271 = vld [vmem:[#allocation10 + $0x68] sm:$0xff]
        %v272 = vld [vmem:[#allocation10 + $0x70] sm:$0xff]
        %v273 = vld [vmem:[#allocation10 + $0x78] sm:$0xff]
        %v274 = vld [vmem:[#allocation10 + $0x80] sm:$0xff]
        %v275 = vld [vmem:[#allocation10 + $0x88] sm:$0xff]
        %v276 = vld [vmem:[#allocation10 + $0x90] sm:$0xff]
        %v277 = vld [vmem:[#allocation10 + $0x98] sm:$0xff]
        %v278 = vld [vmem:[#allocation10 + $0xa0] sm:$0xff]
        %v279 = vld [vmem:[#allocation10 + $0xa8] sm:$0xff]
        %v280 = vld [vmem:[#allocation10 + $0xb0] sm:$0xff]
        %v281 = vld [vmem:[#allocation10 + $0xb8] sm:$0xff]
        %v282 = vld [vmem:[#allocation10 + $0xc0] sm:$0xff]
        %v283 = vld [vmem:[#allocation10 + $0xc8] sm:$0xff]
        %v284 = vld [vmem:[#allocation10 + $0xd0] sm:$0xff]
        %v285 = vld [vmem:[#allocation10 + $0xd8] sm:$0xff]
        %v286 = vld [vmem:[#allocation10 + $0xe0] sm:$0xff]
        %v287 = vld [vmem:[#allocation10 + $0xe8] sm:$0xff]
        %v288 = vld [vmem:[#allocation10 + $0xf0] sm:$0xff]
        %v289 = vld [vmem:[#allocation10 + $0xf8] sm:$0xff]
        %v290 = vld [vmem:[#allocation10 + $0x100] sm:$0xff]
        %v291 = vld [vmem:[#allocation10 + $0x108] sm:$0xff]
        %v292 = vld [vmem:[#allocation10 + $0x110] sm:$0xff]
        %v293 = vld [vmem:[#allocation10 + $0x118] sm:$0xff]
        %v294 = vld [vmem:[#allocation10 + $0x120] sm:$0xff]
        %v295 = vld [vmem:[#allocation10 + $0x128] sm:$0xff]
        %v296 = vld [vmem:[#allocation10 + $0x130] sm:$0xff]
        %v297 = vld [vmem:[#allocation10 + $0x138] sm:$0xff]
        %v298 = vld [vmem:[#allocation10 + $0x140] sm:$0xff]
        %v299 = vld [vmem:[#allocation10 + $0x148] sm:$0xff]
        %v300 = vld [vmem:[#allocation10 + $0x150] sm:$0xff]
        %v301 = vld [vmem:[#allocation10 + $0x158] sm:$0xff]
        %v302 = vld [vmem:[#allocation10 + $0x160] sm:$0xff]
        %v303 = vld [vmem:[#allocation10 + $0x168] sm:$0xff]
        %v304 = vld [vmem:[#allocation10 + $0x170] sm:$0xff]
        %v305 = vld [vmem:[#allocation10 + $0x178] sm:$0xff]
        %v306 = vld [vmem:[#allocation10 + $0x180] sm:$0xff]
        %v307 = vld [vmem:[#allocation10 + $0x188] sm:$0xff]
        %v308 = vld [vmem:[#allocation10 + $0x190] sm:$0xff]
        %v309 = vld [vmem:[#allocation10 + $0x198] sm:$0xff]
        %v310 = vld [vmem:[#allocation10 + $0x1a0] sm:$0xff]
        %v311 = vld [vmem:[#allocation10 + $0x1a8] sm:$0xff]
        %v312 = vld [vmem:[#allocation10 + $0x1b0] sm:$0xff]
        %v313 = vld [vmem:[#allocation10 + $0x1b8] sm:$0xff]
        %v314 = vld [vmem:[#allocation10 + $0x1c0] sm:$0xff]
        %v315 = vld [vmem:[#allocation10 + $0x1c8] sm:$0xff]
        %v316 = vld [vmem:[#allocation10 + $0x1d0] sm:$0xff]
        %v317 = vld [vmem:[#allocation10 + $0x1d8] sm:$0xff]
        %v318 = vld [vmem:[#allocation10 + $0x1e0] sm:$0xff]
        %v319 = vld [vmem:[#allocation10 + $0x1e8] sm:$0xff]
        %v320 = vld [vmem:[#allocation10 + $0x1f0] sm:$0xff]
        %v321 = vld [vmem:[#allocation10 + $0x1f8] sm:$0xff]
        %v322 = vld [vmem:[%s4] sm:$0x3]
        %v323 = vlaneseq
        %v324 = vshrl.u32 %v323, 7
        %v325 = vld [vmem:[#allocation2] sm:$0xff]
        %v326 = vld [vmem:[#allocation2 + $0x8] sm:$0xff]
        %s327 = smul.u32 %s28, 8
        %s328 = smul.u32 %s28, 16
        %s329 = sld [smem:[#allocation4 + %s328]]
        %s330 = smul.u32 %s329, 2
        %s331 = scalar_lea.vmem [#allocation8], %s330
        %v332 = vld [vmem:[%s331] sm:$0x3]
        %vm333 = vcmp.eq.s32.totalorder %v324, 0
        %v334 = vsel %vm333, 1, 0
        %vm335 = vcmp.eq.s32.totalorder %v334, 1
        %v337 = vlaneseq
        %v338 = vshrl.u32 %v337, 7
        %v339 = vsub.s32 0, %v338
        %v340 = vrot.slane %v332, %v339
        %v341 = vlaneseq
        %v342 = vshrl.u32 %v341, 7
        %v343 = vsub.s32 1, %v342
        %v344 = vrot.slane %v332, %v343
        %v347 = vsel %vm335, %v340, 0.0
        %v348 = vsel %vm335, %v344, 0.0
        %v349 = vadd.f32 %v347, 0.0
        %v350 = vadd.f32 %v348, 0.0
        %s351 = sadd.s32 %s328, 1
        %s352 = sld [smem:[#allocation4 + %s351]]
        %s353 = smul.u32 %s352, 2
        %s354 = scalar_lea.vmem [#allocation8], %s353
        %v355 = vld [vmem:[%s354] sm:$0x3]
        %vm356 = vcmp.eq.s32.totalorder %v324, 1
        %v357 = vsel %vm356, 1, 0
        %vm358 = vcmp.eq.s32.totalorder %v357, 1
        %v360 = vlaneseq
        %v361 = vshrl.u32 %v360, 7
        %v362 = vsub.s32 0, %v361
        %v363 = vrot.slane %v355, %v362
        %v364 = vlaneseq
        %v365 = vshrl.u32 %v364, 7
        %v366 = vsub.s32 1, %v365
        %v367 = vrot.slane %v355, %v366
        %v370 = vsel %vm358, %v363, 0.0
        %v371 = vsel %vm358, %v367, 0.0
        %v372 = vadd.f32 %v349, %v370
        %v373 = vadd.f32 %v350, %v371
        %374 = vmatprep.subr.mxu0 %v259
        %375 = vmatpush1.msra.mxu0 %v258
        %376 = vmatprep.subr.mxu0 %v261
        %377 = vmatpush1.msra.mxu0 %v260
        %378 = vmatprep.subr.mxu0 %v263
        %379 = vmatpush1.msra.mxu0 %v262
        %380 = vmatprep.subr.mxu0 %v265
        %381 = vmatpush1.msra.mxu0 %v264
        %382 = vmatprep.subr.mxu0 %v267
        %383 = vmatpush1.msra.mxu0 %v266
        %384 = vmatprep.subr.mxu0 %v269
        %385 = vmatpush1.msra.mxu0 %v268
        %386 = vmatprep.subr.mxu0 %v271
        %387 = vmatpush1.msra.mxu0 %v270
        %388 = vmatprep.subr.mxu0 %v273
        %389 = vmatpush1.msra.mxu0 %v272
        %390 = vmatprep.subr.mxu0 %v275
        %391 = vmatpush1.msra.mxu0 %v274
        %392 = vmatprep.subr.mxu0 %v277
        %393 = vmatpush1.msra.mxu0 %v276
        %394 = vmatprep.subr.mxu0 %v279
        %395 = vmatpush1.msra.mxu0 %v278
        %396 = vmatprep.subr.mxu0 %v281
        %397 = vmatpush1.msra.mxu0 %v280
        %398 = vmatprep.subr.mxu0 %v283
        %399 = vmatpush1.msra.mxu0 %v282
        %400 = vmatprep.subr.mxu0 %v285
        %401 = vmatpush1.msra.mxu0 %v284
        %402 = vmatprep.subr.mxu0 %v287
        %403 = vmatpush1.msra.mxu0 %v286
        %404 = vmatprep.subr.mxu0 %v289
        %405 = vmatpush1.msra.mxu0 %v288
        %406 = vmatprep.subr.mxu0 %v291
        %407 = vmatpush1.msra.mxu0 %v290
        %408 = vmatprep.subr.mxu0 %v293
        %409 = vmatpush1.msra.mxu0 %v292
        %410 = vmatprep.subr.mxu0 %v295
        %411 = vmatpush1.msra.mxu0 %v294
        %412 = vmatprep.subr.mxu0 %v297
        %413 = vmatpush1.msra.mxu0 %v296
        %414 = vmatprep.subr.mxu0 %v299
        %415 = vmatpush1.msra.mxu0 %v298
        %416 = vmatprep.subr.mxu0 %v301
        %417 = vmatpush1.msra.mxu0 %v300
        %418 = vmatprep.subr.mxu0 %v303
        %419 = vmatpush1.msra.mxu0 %v302
        %420 = vmatprep.subr.mxu0 %v305
        %421 = vmatpush1.msra.mxu0 %v304
        %422 = vmatprep.subr.mxu0 %v307
        %423 = vmatpush1.msra.mxu0 %v306
        %424 = vmatprep.subr.mxu0 %v309
        %425 = vmatpush1.msra.mxu0 %v308
        %426 = vmatprep.subr.mxu0 %v311
        %427 = vmatpush1.msra.mxu0 %v310
        %428 = vmatprep.subr.mxu0 %v313
        %429 = vmatpush1.msra.mxu0 %v312
        %430 = vmatprep.subr.mxu0 %v315
        %431 = vmatpush1.msra.mxu0 %v314
        %432 = vmatprep.subr.mxu0 %v317
        %433 = vmatpush1.msra.mxu0 %v316
        %434 = vmatprep.subr.mxu0 %v319
        %435 = vmatpush1.msra.mxu0 %v318
        %436 = vmatprep.subr.mxu0 %v321
        %437 = vmatpush1.msra.mxu0 %v320
        %438 = vmatprep.mubr.f32.mxu0 %v326
        %439 = vmatmul.mubr.f32.gmra.mrb[0].mxu0 %v325
        %v440 = vpop.f32.mrb[0].mxu0
        %v441 = vadd.f32 0.0, %v440
        %v442 = vpop.f32.mrb[0].mxu0
        %v443 = vadd.f32 0.0, %v442
        %444 = vdwg.mxu0
        %v445 = vadd.f32 %v372, %v441
        %v446 = vadd.f32 %v373, %v443
        %v448 = vlaneseq
        %v449 = vshrl.u32 %v448, 7
        %v450 = vsub.s32 0, %v449
        %v451 = vrot.slane %v322, %v450
        %v452 = vlaneseq
        %v453 = vshrl.u32 %v452, 7
        %v454 = vsub.s32 1, %v453
        %v455 = vrot.slane %v322, %v454
        %v458 = vadd.f32 %v445, %v451
        %v459 = vadd.f32 %v446, %v455
        %v460 = vtanh.pop %v458
        %v461 = vtanh.pop %v459
        %462 = vst [vmem:[%s246] sm:$0xff] %v460
        %463 = vst [vmem:[%s246 + $0x8] sm:$0xff] %v461
        %p464 = scmp.lt.s32.totalorder %s327, 35
        %s465 = scalar_select %p464, 1, 0
        %v466 = vstv %s465
        %vm467 = vcmp.eq.s32.totalorder %v466, 1
        %v468 = vsel %vm467, %v460, %v325
        %v469 = vsel %vm467, %v461, %v326
        %s470 = sadd.s32 %s327, 1
        %s471 = smul.u32 %s470, 2
        %s472 = sld [smem:[#allocation4 + %s471]]
        %s473 = smul.u32 %s472, 2
        %s474 = scalar_lea.vmem [#allocation8], %s473
        %v475 = vld [vmem:[%s474] sm:$0x3]
        %v477 = vlaneseq
        %v478 = vshrl.u32 %v477, 7
        %v479 = vsub.s32 0, %v478
        %v480 = vrot.slane %v475, %v479
        %v481 = vlaneseq
        %v482 = vshrl.u32 %v481, 7
        %v483 = vsub.s32 1, %v482
        %v484 = vrot.slane %v475, %v483
        %v487 = vsel %vm335, %v480, 0.0
        %v488 = vsel %vm335, %v484, 0.0
        %v489 = vadd.f32 %v487, 0.0
        %v490 = vadd.f32 %v488, 0.0
        %s491 = sadd.s32 %s471, 1
        %s492 = sld [smem:[#allocation4 + %s491]]
        %s493 = smul.u32 %s492, 2
        %s494 = scalar_lea.vmem [#allocation8], %s493
        %v495 = vld [vmem:[%s494] sm:$0x3]
        %v497 = vlaneseq
        %v498 = vshrl.u32 %v497, 7
        %v499 = vsub.s32 0, %v498
        %v500 = vrot.slane %v495, %v499
        %v501 = vlaneseq
        %v502 = vshrl.u32 %v501, 7
        %v503 = vsub.s32 1, %v502
        %v504 = vrot.slane %v495, %v503
        %v507 = vsel %vm358, %v500, 0.0
        %v508 = vsel %vm358, %v504, 0.0
        %v509 = vadd.f32 %v489, %v507
        %v510 = vadd.f32 %v490, %v508
        %511 = vmatprep.subr.mxu0 %v259
        %512 = vmatpush1.msra.mxu0 %v258
        %513 = vmatprep.subr.mxu0 %v261
        %514 = vmatpush1.msra.mxu0 %v260
        %515 = vmatprep.subr.mxu0 %v263
        %516 = vmatpush1.msra.mxu0 %v262
        %517 = vmatprep.subr.mxu0 %v265
        %518 = vmatpush1.msra.mxu0 %v264
        %519 = vmatprep.subr.mxu0 %v267
        %520 = vmatpush1.msra.mxu0 %v266
        %521 = vmatprep.subr.mxu0 %v269
        %522 = vmatpush1.msra.mxu0 %v268
        %523 = vmatprep.subr.mxu0 %v271
        %524 = vmatpush1.msra.mxu0 %v270
        %525 = vmatprep.subr.mxu0 %v273
        %526 = vmatpush1.msra.mxu0 %v272
        %527 = vmatprep.subr.mxu0 %v275
        %528 = vmatpush1.msra.mxu0 %v274
        %529 = vmatprep.subr.mxu0 %v277
        %530 = vmatpush1.msra.mxu0 %v276
        %531 = vmatprep.subr.mxu0 %v279
        %532 = vmatpush1.msra.mxu0 %v278
        %533 = vmatprep.subr.mxu0 %v281
        %534 = vmatpush1.msra.mxu0 %v280
        %535 = vmatprep.subr.mxu0 %v283
        %536 = vmatpush1.msra.mxu0 %v282
        %537 = vmatprep.subr.mxu0 %v285
        %538 = vmatpush1.msra.mxu0 %v284
        %539 = vmatprep.subr.mxu0 %v287
        %540 = vmatpush1.msra.mxu0 %v286
        %541 = vmatprep.subr.mxu0 %v289
        %542 = vmatpush1.msra.mxu0 %v288
        %543 = vmatprep.subr.mxu0 %v291
        %544 = vmatpush1.msra.mxu0 %v290
        %545 = vmatprep.subr.mxu0 %v293
        %546 = vmatpush1.msra.mxu0 %v292
        %547 = vmatprep.subr.mxu0 %v295
        %548 = vmatpush1.msra.mxu0 %v294
        %549 = vmatprep.subr.mxu0 %v297
        %550 = vmatpush1.msra.mxu0 %v296
        %551 = vmatprep.subr.mxu0 %v299
        %552 = vmatpush1.msra.mxu0 %v298
        %553 = vmatprep.subr.mxu0 %v301
        %554 = vmatpush1.msra.mxu0 %v300
        %555 = vmatprep.subr.mxu0 %v303
        %556 = vmatpush1.msra.mxu0 %v302
        %557 = vmatprep.subr.mxu0 %v305
        %558 = vmatpush1.msra.mxu0 %v304
        %559 = vmatprep.subr.mxu0 %v307
        %560 = vmatpush1.msra.mxu0 %v306
        %561 = vmatprep.subr.mxu0 %v309
        %562 = vmatpush1.msra.mxu0 %v308
        %563 = vmatprep.subr.mxu0 %v311
        %564 = vmatpush1.msra.mxu0 %v310
        %565 = vmatprep.subr.mxu0 %v313
        %566 = vmatpush1.msra.mxu0 %v312
        %567 = vmatprep.subr.mxu0 %v315
        %568 = vmatpush1.msra.mxu0 %v314
        %569 = vmatprep.subr.mxu0 %v317
        %570 = vmatpush1.msra.mxu0 %v316
        %571 = vmatprep.subr.mxu0 %v319
        %572 = vmatpush1.msra.mxu0 %v318
        %573 = vmatprep.subr.mxu0 %v321
        %574 = vmatpush1.msra.mxu0 %v320
        %575 = vmatprep.mubr.f32.mxu0 %v469
        %576 = vmatmul.mubr.f32.gmra.mrb[0].mxu0 %v468
        %v577 = vpop.f32.mrb[0].mxu0
        %v578 = vadd.f32 0.0, %v577
        %v579 = vpop.f32.mrb[0].mxu0
        %v580 = vadd.f32 0.0, %v579
        %581 = vdwg.mxu0
        %v582 = vadd.f32 %v509, %v578
        %v583 = vadd.f32 %v510, %v580
        %v584 = vadd.f32 %v582, %v451
        %v585 = vadd.f32 %v583, %v455
        %v586 = vtanh.pop %v584
        %v587 = vtanh.pop %v585
        %s588 = scalar_lea.vmem %s246, 16 [#allocation11]
        %589 = vst [vmem:[%s588] sm:$0xff] %v586
        %590 = vst [vmem:[%s588 + $0x8] sm:$0xff] %v587
        %p591 = scmp.lt.s32.totalorder %s470, 35
        %s592 = scalar_select %p591, 1, 0
        %v593 = vstv %s592
        %vm594 = vcmp.eq.s32.totalorder %v593, 1
        %v595 = vsel %vm594, %v586, %v468
        %v596 = vsel %vm594, %v587, %v469
        %s597 = sadd.s32 %s327, 2
        %s598 = smul.u32 %s597, 2
        %s599 = sld [smem:[#allocation4 + %s598]]
        %s600 = smul.u32 %s599, 2
        %s601 = scalar_lea.vmem [#allocation8], %s600
        %v602 = vld [vmem:[%s601] sm:$0x3]
        %v604 = vlaneseq
        %v605 = vshrl.u32 %v604, 7
        %v606 = vsub.s32 0, %v605
        %v607 = vrot.slane %v602, %v606
        %v608 = vlaneseq
        %v609 = vshrl.u32 %v608, 7
        %v610 = vsub.s32 1, %v609
        %v611 = vrot.slane %v602, %v610
        %v614 = vsel %vm335, %v607, 0.0
        %v615 = vsel %vm335, %v611, 0.0
        %v616 = vadd.f32 %v614, 0.0
        %v617 = vadd.f32 %v615, 0.0
        %s618 = sadd.s32 %s598, 1
        %s619 = sld [smem:[#allocation4 + %s618]]
        %s620 = smul.u32 %s619, 2
        %s621 = scalar_lea.vmem [#allocation8], %s620
        %v622 = vld [vmem:[%s621] sm:$0x3]
        %v624 = vlaneseq
        %v625 = vshrl.u32 %v624, 7
        %v626 = vsub.s32 0, %v625
        %v627 = vrot.slane %v622, %v626
        %v628 = vlaneseq
        %v629 = vshrl.u32 %v628, 7
        %v630 = vsub.s32 1, %v629
        %v631 = vrot.slane %v622, %v630
        %v634 = vsel %vm358, %v627, 0.0
        %v635 = vsel %vm358, %v631, 0.0
        %v636 = vadd.f32 %v616, %v634
        %v637 = vadd.f32 %v617, %v635
        %638 = vmatprep.subr.mxu0 %v259
        %639 = vmatpush1.msra.mxu0 %v258
        %640 = vmatprep.subr.mxu0 %v261
        %641 = vmatpush1.msra.mxu0 %v260
        %642 = vmatprep.subr.mxu0 %v263
        %643 = vmatpush1.msra.mxu0 %v262
        %644 = vmatprep.subr.mxu0 %v265
        %645 = vmatpush1.msra.mxu0 %v264
        %646 = vmatprep.subr.mxu0 %v267
        %647 = vmatpush1.msra.mxu0 %v266
        %648 = vmatprep.subr.mxu0 %v269
        %649 = vmatpush1.msra.mxu0 %v268
        %650 = vmatprep.subr.mxu0 %v271
        %651 = vmatpush1.msra.mxu0 %v270
        %652 = vmatprep.subr.mxu0 %v273
        %653 = vmatpush1.msra.mxu0 %v272
        %654 = vmatprep.subr.mxu0 %v275
        %655 = vmatpush1.msra.mxu0 %v274
        %656 = vmatprep.subr.mxu0 %v277
        %657 = vmatpush1.msra.mxu0 %v276
        %658 = vmatprep.subr.mxu0 %v279
        %659 = vmatpush1.msra.mxu0 %v278
        %660 = vmatprep.subr.mxu0 %v281
        %661 = vmatpush1.msra.mxu0 %v280
        %662 = vmatprep.subr.mxu0 %v283
        %663 = vmatpush1.msra.mxu0 %v282
        %664 = vmatprep.subr.mxu0 %v285
        %665 = vmatpush1.msra.mxu0 %v284
        %666 = vmatprep.subr.mxu0 %v287
        %667 = vmatpush1.msra.mxu0 %v286
        %668 = vmatprep.subr.mxu0 %v289
        %669 = vmatpush1.msra.mxu0 %v288
        %670 = vmatprep.subr.mxu0 %v291
        %671 = vmatpush1.msra.mxu0 %v290
        %672 = vmatprep.subr.mxu0 %v293
        %673 = vmatpush1.msra.mxu0 %v292
        %674 = vmatprep.subr.mxu0 %v295
        %675 = vmatpush1.msra.mxu0 %v294
        %676 = vmatprep.subr.mxu0 %v297
        %677 = vmatpush1.msra.mxu0 %v296
        %678 = vmatprep.subr.mxu0 %v299
        %679 = vmatpush1.msra.mxu0 %v298
        %680 = vmatprep.subr.mxu0 %v301
        %681 = vmatpush1.msra.mxu0 %v300
        %682 = vmatprep.subr.mxu0 %v303
        %683 = vmatpush1.msra.mxu0 %v302
        %684 = vmatprep.subr.mxu0 %v305
        %685 = vmatpush1.msra.mxu0 %v304
        %686 = vmatprep.subr.mxu0 %v307
        %687 = vmatpush1.msra.mxu0 %v306
        %688 = vmatprep.subr.mxu0 %v309
        %689 = vmatpush1.msra.mxu0 %v308
        %690 = vmatprep.subr.mxu0 %v311
        %691 = vmatpush1.msra.mxu0 %v310
        %692 = vmatprep.subr.mxu0 %v313
        %693 = vmatpush1.msra.mxu0 %v312
        %694 = vmatprep.subr.mxu0 %v315
        %695 = vmatpush1.msra.mxu0 %v314
        %696 = vmatprep.subr.mxu0 %v317
        %697 = vmatpush1.msra.mxu0 %v316
        %698 = vmatprep.subr.mxu0 %v319
        %699 = vmatpush1.msra.mxu0 %v318
        %700 = vmatprep.subr.mxu0 %v321
        %701 = vmatpush1.msra.mxu0 %v320
        %702 = vmatprep.mubr.f32.mxu0 %v596
        %703 = vmatmul.mubr.f32.gmra.mrb[0].mxu0 %v595
        %v704 = vpop.f32.mrb[0].mxu0
        %v705 = vadd.f32 0.0, %v704
        %v706 = vpop.f32.mrb[0].mxu0
        %v707 = vadd.f32 0.0, %v706
        %708 = vdwg.mxu0
        %v709 = vadd.f32 %v636, %v705
        %v710 = vadd.f32 %v637, %v707
        %v711 = vadd.f32 %v709, %v451
        %v712 = vadd.f32 %v710, %v455
        %v713 = vtanh.pop %v711
        %v714 = vtanh.pop %v712
        %s715 = scalar_lea.vmem %s246, 32 [#allocation11]
        %716 = vst [vmem:[%s715] sm:$0xff] %v713
        %717 = vst [vmem:[%s715 + $0x8] sm:$0xff] %v714
        %p718 = scmp.lt.s32.totalorder %s597, 35
        %s719 = scalar_select %p718, 1, 0
        %v720 = vstv %s719
        %vm721 = vcmp.eq.s32.totalorder %v720, 1
        %v722 = vsel %vm721, %v713, %v595
        %v723 = vsel %vm721, %v714, %v596
        %s724 = sadd.s32 %s327, 3
        %s725 = smul.u32 %s724, 2
        %s726 = sld [smem:[#allocation4 + %s725]]
        %s727 = smul.u32 %s726, 2
        %s728 = scalar_lea.vmem [#allocation8], %s727
        %v729 = vld [vmem:[%s728] sm:$0x3]
        %v731 = vlaneseq
        %v732 = vshrl.u32 %v731, 7
        %v733 = vsub.s32 0, %v732
        %v734 = vrot.slane %v729, %v733
        %v735 = vlaneseq
        %v736 = vshrl.u32 %v735, 7
        %v737 = vsub.s32 1, %v736
        %v738 = vrot.slane %v729, %v737
        %v741 = vsel %vm335, %v734, 0.0
        %v742 = vsel %vm335, %v738, 0.0
        %v743 = vadd.f32 %v741, 0.0
        %v744 = vadd.f32 %v742, 0.0
        %s745 = sadd.s32 %s725, 1
        %s746 = sld [smem:[#allocation4 + %s745]]
        %s747 = smul.u32 %s746, 2
        %s748 = scalar_lea.vmem [#allocation8], %s747
        %v749 = vld [vmem:[%s748] sm:$0x3]
        %v751 = vlaneseq
        %v752 = vshrl.u32 %v751, 7
        %v753 = vsub.s32 0, %v752
        %v754 = vrot.slane %v749, %v753
        %v755 = vlaneseq
        %v756 = vshrl.u32 %v755, 7
        %v757 = vsub.s32 1, %v756
        %v758 = vrot.slane %v749, %v757
        %v761 = vsel %vm358, %v754, 0.0
        %v762 = vsel %vm358, %v758, 0.0
        %v763 = vadd.f32 %v743, %v761
        %v764 = vadd.f32 %v744, %v762
        %765 = vmatprep.subr.mxu0 %v259
        %766 = vmatpush1.msra.mxu0 %v258
        %767 = vmatprep.subr.mxu0 %v261
        %768 = vmatpush1.msra.mxu0 %v260
        %769 = vmatprep.subr.mxu0 %v263
        %770 = vmatpush1.msra.mxu0 %v262
        %771 = vmatprep.subr.mxu0 %v265
        %772 = vmatpush1.msra.mxu0 %v264
        %773 = vmatprep.subr.mxu0 %v267
        %774 = vmatpush1.msra.mxu0 %v266
        %775 = vmatprep.subr.mxu0 %v269
        %776 = vmatpush1.msra.mxu0 %v268
        %777 = vmatprep.subr.mxu0 %v271
        %778 = vmatpush1.msra.mxu0 %v270
        %779 = vmatprep.subr.mxu0 %v273
        %780 = vmatpush1.msra.mxu0 %v272
        %781 = vmatprep.subr.mxu0 %v275
        %782 = vmatpush1.msra.mxu0 %v274
        %783 = vmatprep.subr.mxu0 %v277
        %784 = vmatpush1.msra.mxu0 %v276
        %785 = vmatprep.subr.mxu0 %v279
        %786 = vmatpush1.msra.mxu0 %v278
        %787 = vmatprep.subr.mxu0 %v281
        %788 = vmatpush1.msra.mxu0 %v280
        %789 = vmatprep.subr.mxu0 %v283
        %790 = vmatpush1.msra.mxu0 %v282
        %791 = vmatprep.subr.mxu0 %v285
        %792 = vmatpush1.msra.mxu0 %v284
        %793 = vmatprep.subr.mxu0 %v287
        %794 = vmatpush1.msra.mxu0 %v286
        %795 = vmatprep.subr.mxu0 %v289
        %796 = vmatpush1.msra.mxu0 %v288
        %797 = vmatprep.subr.mxu0 %v291
        %798 = vmatpush1.msra.mxu0 %v290
        %799 = vmatprep.subr.mxu0 %v293
        %800 = vmatpush1.msra.mxu0 %v292
        %801 = vmatprep.subr.mxu0 %v295
        %802 = vmatpush1.msra.mxu0 %v294
        %803 = vmatprep.subr.mxu0 %v297
        %804 = vmatpush1.msra.mxu0 %v296
        %805 = vmatprep.subr.mxu0 %v299
        %806 = vmatpush1.msra.mxu0 %v298
        %807 = vmatprep.subr.mxu0 %v301
        %808 = vmatpush1.msra.mxu0 %v300
        %809 = vmatprep.subr.mxu0 %v303
        %810 = vmatpush1.msra.mxu0 %v302
        %811 = vmatprep.subr.mxu0 %v305
        %812 = vmatpush1.msra.mxu0 %v304
        %813 = vmatprep.subr.mxu0 %v307
        %814 = vmatpush1.msra.mxu0 %v306
        %815 = vmatprep.subr.mxu0 %v309
        %816 = vmatpush1.msra.mxu0 %v308
        %817 = vmatprep.subr.mxu0 %v311
        %818 = vmatpush1.msra.mxu0 %v310
        %819 = vmatprep.subr.mxu0 %v313
        %820 = vmatpush1.msra.mxu0 %v312
        %821 = vmatprep.subr.mxu0 %v315
        %822 = vmatpush1.msra.mxu0 %v314
        %823 = vmatprep.subr.mxu0 %v317
        %824 = vmatpush1.msra.mxu0 %v316
        %825 = vmatprep.subr.mxu0 %v319
        %826 = vmatpush1.msra.mxu0 %v318
        %827 = vmatprep.subr.mxu0 %v321
        %828 = vmatpush1.msra.mxu0 %v320
        %829 = vmatprep.mubr.f32.mxu0 %v723
        %830 = vmatmul.mubr.f32.gmra.mrb[0].mxu0 %v722
        %v831 = vpop.f32.mrb[0].mxu0
        %v832 = vadd.f32 0.0, %v831
        %v833 = vpop.f32.mrb[0].mxu0
        %v834 = vadd.f32 0.0, %v833
        %835 = vdwg.mxu0
        %v836 = vadd.f32 %v763, %v832
        %v837 = vadd.f32 %v764, %v834
        %v838 = vadd.f32 %v836, %v451
        %v839 = vadd.f32 %v837, %v455
        %v840 = vtanh.pop %v838
        %v841 = vtanh.pop %v839
        %s842 = scalar_lea.vmem %s246, 48 [#allocation11]
        %843 = vst [vmem:[%s842] sm:$0xff] %v840
        %844 = vst [vmem:[%s842 + $0x8] sm:$0xff] %v841
        %p845 = scmp.lt.s32.totalorder %s724, 35
        %s846 = scalar_select %p845, 1, 0
        %v847 = vstv %s846
        %vm848 = vcmp.eq.s32.totalorder %v847, 1
        %v849 = vsel %vm848, %v840, %v722
        %v850 = vsel %vm848, %v841, %v723
        %s851 = sadd.s32 %s327, 4
        %s852 = smul.u32 %s851, 2
        %s853 = sld [smem:[#allocation4 + %s852]]
        %s854 = smul.u32 %s853, 2
        %s855 = scalar_lea.vmem [#allocation8], %s854
        %v856 = vld [vmem:[%s855] sm:$0x3]
        %v858 = vlaneseq
        %v859 = vshrl.u32 %v858, 7
        %v860 = vsub.s32 0, %v859
        %v861 = vrot.slane %v856, %v860
        %v862 = vlaneseq
        %v863 = vshrl.u32 %v862, 7
        %v864 = vsub.s32 1, %v863
        %v865 = vrot.slane %v856, %v864
        %v868 = vsel %vm335, %v861, 0.0
        %v869 = vsel %vm335, %v865, 0.0
        %v870 = vadd.f32 %v868, 0.0
        %v871 = vadd.f32 %v869, 0.0
        %s872 = sadd.s32 %s852, 1
        %s873 = sld [smem:[#allocation4 + %s872]]
        %s874 = smul.u32 %s873, 2
        %s875 = scalar_lea.vmem [#allocation8], %s874
        %v876 = vld [vmem:[%s875] sm:$0x3]
        %v878 = vlaneseq
        %v879 = vshrl.u32 %v878, 7
        %v880 = vsub.s32 0, %v879
        %v881 = vrot.slane %v876, %v880
        %v882 = vlaneseq
        %v883 = vshrl.u32 %v882, 7
        %v884 = vsub.s32 1, %v883
        %v885 = vrot.slane %v876, %v884
        %v888 = vsel %vm358, %v881, 0.0
        %v889 = vsel %vm358, %v885, 0.0
        %v890 = vadd.f32 %v870, %v888
        %v891 = vadd.f32 %v871, %v889
        %892 = vmatprep.subr.mxu0 %v259
        %893 = vmatpush1.msra.mxu0 %v258
        %894 = vmatprep.subr.mxu0 %v261
        %895 = vmatpush1.msra.mxu0 %v260
        %896 = vmatprep.subr.mxu0 %v263
        %897 = vmatpush1.msra.mxu0 %v262
        %898 = vmatprep.subr.mxu0 %v265
        %899 = vmatpush1.msra.mxu0 %v264
        %900 = vmatprep.subr.mxu0 %v267
        %901 = vmatpush1.msra.mxu0 %v266
        %902 = vmatprep.subr.mxu0 %v269
        %903 = vmatpush1.msra.mxu0 %v268
        %904 = vmatprep.subr.mxu0 %v271
        %905 = vmatpush1.msra.mxu0 %v270
        %906 = vmatprep.subr.mxu0 %v273
        %907 = vmatpush1.msra.mxu0 %v272
        %908 = vmatprep.subr.mxu0 %v275
        %909 = vmatpush1.msra.mxu0 %v274
        %910 = vmatprep.subr.mxu0 %v277
        %911 = vmatpush1.msra.mxu0 %v276
        %912 = vmatprep.subr.mxu0 %v279
        %913 = vmatpush1.msra.mxu0 %v278
        %914 = vmatprep.subr.mxu0 %v281
        %915 = vmatpush1.msra.mxu0 %v280
        %916 = vmatprep.subr.mxu0 %v283
        %917 = vmatpush1.msra.mxu0 %v282
        %918 = vmatprep.subr.mxu0 %v285
        %919 = vmatpush1.msra.mxu0 %v284
        %920 = vmatprep.subr.mxu0 %v287
        %921 = vmatpush1.msra.mxu0 %v286
        %922 = vmatprep.subr.mxu0 %v289
        %923 = vmatpush1.msra.mxu0 %v288
        %924 = vmatprep.subr.mxu0 %v291
        %925 = vmatpush1.msra.mxu0 %v290
        %926 = vmatprep.subr.mxu0 %v293
        %927 = vmatpush1.msra.mxu0 %v292
        %928 = vmatprep.subr.mxu0 %v295
        %929 = vmatpush1.msra.mxu0 %v294
        %930 = vmatprep.subr.mxu0 %v297
        %931 = vmatpush1.msra.mxu0 %v296
        %932 = vmatprep.subr.mxu0 %v299
        %933 = vmatpush1.msra.mxu0 %v298
        %934 = vmatprep.subr.mxu0 %v301
        %935 = vmatpush1.msra.mxu0 %v300
        %936 = vmatprep.subr.mxu0 %v303
        %937 = vmatpush1.msra.mxu0 %v302
        %938 = vmatprep.subr.mxu0 %v305
        %939 = vmatpush1.msra.mxu0 %v304
        %940 = vmatprep.subr.mxu0 %v307
        %941 = vmatpush1.msra.mxu0 %v306
        %942 = vmatprep.subr.mxu0 %v309
        %943 = vmatpush1.msra.mxu0 %v308
        %944 = vmatprep.subr.mxu0 %v311
        %945 = vmatpush1.msra.mxu0 %v310
        %946 = vmatprep.subr.mxu0 %v313
        %947 = vmatpush1.msra.mxu0 %v312
        %948 = vmatprep.subr.mxu0 %v315
        %949 = vmatpush1.msra.mxu0 %v314
        %950 = vmatprep.subr.mxu0 %v317
        %951 = vmatpush1.msra.mxu0 %v316
        %952 = vmatprep.subr.mxu0 %v319
        %953 = vmatpush1.msra.mxu0 %v318
        %954 = vmatprep.subr.mxu0 %v321
        %955 = vmatpush1.msra.mxu0 %v320
        %956 = vmatprep.mubr.f32.mxu0 %v850
        %957 = vmatmul.mubr.f32.gmra.mrb[0].mxu0 %v849
        %v958 = vpop.f32.mrb[0].mxu0
        %v959 = vadd.f32 0.0, %v958
        %v960 = vpop.f32.mrb[0].mxu0
        %v961 = vadd.f32 0.0, %v960
        %962 = vdwg.mxu0
        %v963 = vadd.f32 %v890, %v959
        %v964 = vadd.f32 %v891, %v961
        %v965 = vadd.f32 %v963, %v451
        %v966 = vadd.f32 %v964, %v455
        %v967 = vtanh.pop %v965
        %v968 = vtanh.pop %v966
        %s969 = scalar_lea.vmem %s246, 64 [#allocation11]
        %970 = vst [vmem:[%s969] sm:$0xff] %v967
        %971 = vst [vmem:[%s969 + $0x8] sm:$0xff] %v968
        %p972 = scmp.lt.s32.totalorder %s851, 35
        %s973 = scalar_select %p972, 1, 0
        %v974 = vstv %s973
        %vm975 = vcmp.eq.s32.totalorder %v974, 1
        %v976 = vsel %vm975, %v967, %v849
        %v977 = vsel %vm975, %v968, %v850
        %s978 = sadd.s32 %s327, 5
        %s979 = smul.u32 %s978, 2
        %s980 = sld [smem:[#allocation4 + %s979]]
        %s981 = smul.u32 %s980, 2
        %s982 = scalar_lea.vmem [#allocation8], %s981
        %v983 = vld [vmem:[%s982] sm:$0x3]
        %v985 = vlaneseq
        %v986 = vshrl.u32 %v985, 7
        %v987 = vsub.s32 0, %v986
        %v988 = vrot.slane %v983, %v987
        %v989 = vlaneseq
        %v990 = vshrl.u32 %v989, 7
        %v991 = vsub.s32 1, %v990
        %v992 = vrot.slane %v983, %v991
        %v995 = vsel %vm335, %v988, 0.0
        %v996 = vsel %vm335, %v992, 0.0
        %v997 = vadd.f32 %v995, 0.0
        %v998 = vadd.f32 %v996, 0.0
        %s999 = sadd.s32 %s979, 1
        %s1000 = sld [smem:[#allocation4 + %s999]]
        %s1001 = smul.u32 %s1000, 2
        %s1002 = scalar_lea.vmem [#allocation8], %s1001
        %v1003 = vld [vmem:[%s1002] sm:$0x3]
        %v1005 = vlaneseq
        %v1006 = vshrl.u32 %v1005, 7
        %v1007 = vsub.s32 0, %v1006
        %v1008 = vrot.slane %v1003, %v1007
        %v1009 = vlaneseq
        %v1010 = vshrl.u32 %v1009, 7
        %v1011 = vsub.s32 1, %v1010
        %v1012 = vrot.slane %v1003, %v1011
        %v1015 = vsel %vm358, %v1008, 0.0
        %v1016 = vsel %vm358, %v1012, 0.0
        %v1017 = vadd.f32 %v997, %v1015
        %v1018 = vadd.f32 %v998, %v1016
        %1019 = vmatprep.subr.mxu0 %v259
        %1020 = vmatpush1.msra.mxu0 %v258
        %1021 = vmatprep.subr.mxu0 %v261
        %1022 = vmatpush1.msra.mxu0 %v260
        %1023 = vmatprep.subr.mxu0 %v263
        %1024 = vmatpush1.msra.mxu0 %v262
        %1025 = vmatprep.subr.mxu0 %v265
        %1026 = vmatpush1.msra.mxu0 %v264
        %1027 = vmatprep.subr.mxu0 %v267
        %1028 = vmatpush1.msra.mxu0 %v266
        %1029 = vmatprep.subr.mxu0 %v269
        %1030 = vmatpush1.msra.mxu0 %v268
        %1031 = vmatprep.subr.mxu0 %v271
        %1032 = vmatpush1.msra.mxu0 %v270
        %1033 = vmatprep.subr.mxu0 %v273
        %1034 = vmatpush1.msra.mxu0 %v272
        %1035 = vmatprep.subr.mxu0 %v275
        %1036 = vmatpush1.msra.mxu0 %v274
        %1037 = vmatprep.subr.mxu0 %v277
        %1038 = vmatpush1.msra.mxu0 %v276
        %1039 = vmatprep.subr.mxu0 %v279
        %1040 = vmatpush1.msra.mxu0 %v278
        %1041 = vmatprep.subr.mxu0 %v281
        %1042 = vmatpush1.msra.mxu0 %v280
        %1043 = vmatprep.subr.mxu0 %v283
        %1044 = vmatpush1.msra.mxu0 %v282
        %1045 = vmatprep.subr.mxu0 %v285
        %1046 = vmatpush1.msra.mxu0 %v284
        %1047 = vmatprep.subr.mxu0 %v287
        %1048 = vmatpush1.msra.mxu0 %v286
        %1049 = vmatprep.subr.mxu0 %v289
        %1050 = vmatpush1.msra.mxu0 %v288
        %1051 = vmatprep.subr.mxu0 %v291
        %1052 = vmatpush1.msra.mxu0 %v290
        %1053 = vmatprep.subr.mxu0 %v293
        %1054 = vmatpush1.msra.mxu0 %v292
        %1055 = vmatprep.subr.mxu0 %v295
        %1056 = vmatpush1.msra.mxu0 %v294
        %1057 = vmatprep.subr.mxu0 %v297
        %1058 = vmatpush1.msra.mxu0 %v296
        %1059 = vmatprep.subr.mxu0 %v299
        %1060 = vmatpush1.msra.mxu0 %v298
        %1061 = vmatprep.subr.mxu0 %v301
        %1062 = vmatpush1.msra.mxu0 %v300
        %1063 = vmatprep.subr.mxu0 %v303
        %1064 = vmatpush1.msra.mxu0 %v302
        %1065 = vmatprep.subr.mxu0 %v305
        %1066 = vmatpush1.msra.mxu0 %v304
        %1067 = vmatprep.subr.mxu0 %v307
        %1068 = vmatpush1.msra.mxu0 %v306
        %1069 = vmatprep.subr.mxu0 %v309
        %1070 = vmatpush1.msra.mxu0 %v308
        %1071 = vmatprep.subr.mxu0 %v311
        %1072 = vmatpush1.msra.mxu0 %v310
        %1073 = vmatprep.subr.mxu0 %v313
        %1074 = vmatpush1.msra.mxu0 %v312
        %1075 = vmatprep.subr.mxu0 %v315
        %1076 = vmatpush1.msra.mxu0 %v314
        %1077 = vmatprep.subr.mxu0 %v317
        %1078 = vmatpush1.msra.mxu0 %v316
        %1079 = vmatprep.subr.mxu0 %v319
        %1080 = vmatpush1.msra.mxu0 %v318
        %1081 = vmatprep.subr.mxu0 %v321
        %1082 = vmatpush1.msra.mxu0 %v320
        %1083 = vmatprep.mubr.f32.mxu0 %v977
        %1084 = vmatmul.mubr.f32.gmra.mrb[0].mxu0 %v976
        %v1085 = vpop.f32.mrb[0].mxu0
        %v1086 = vadd.f32 0.0, %v1085
        %v1087 = vpop.f32.mrb[0].mxu0
        %v1088 = vadd.f32 0.0, %v1087
        %1089 = vdwg.mxu0
        %v1090 = vadd.f32 %v1017, %v1086
        %v1091 = vadd.f32 %v1018, %v1088
        %v1092 = vadd.f32 %v1090, %v451
        %v1093 = vadd.f32 %v1091, %v455
        %v1094 = vtanh.pop %v1092
        %v1095 = vtanh.pop %v1093
        %s1096 = scalar_lea.vmem %s246, 80 [#allocation11]
        %1097 = vst [vmem:[%s1096] sm:$0xff] %v1094
        %1098 = vst [vmem:[%s1096 + $0x8] sm:$0xff] %v1095
        %p1099 = scmp.lt.s32.totalorder %s978, 35
        %s1100 = scalar_select %p1099, 1, 0
        %v1101 = vstv %s1100
        %vm1102 = vcmp.eq.s32.totalorder %v1101, 1
        %v1103 = vsel %vm1102, %v1094, %v976
        %v1104 = vsel %vm1102, %v1095, %v977
        %s1105 = sadd.s32 %s327, 6
        %s1106 = smul.u32 %s1105, 2
        %s1107 = sld [smem:[#allocation4 + %s1106]]
        %s1108 = smul.u32 %s1107, 2
        %s1109 = scalar_lea.vmem [#allocation8], %s1108
        %v1110 = vld [vmem:[%s1109] sm:$0x3]
        %v1112 = vlaneseq
        %v1113 = vshrl.u32 %v1112, 7
        %v1114 = vsub.s32 0, %v1113
        %v1115 = vrot.slane %v1110, %v1114
        %v1116 = vlaneseq
        %v1117 = vshrl.u32 %v1116, 7
        %v1118 = vsub.s32 1, %v1117
        %v1119 = vrot.slane %v1110, %v1118
        %v1122 = vsel %vm335, %v1115, 0.0
        %v1123 = vsel %vm335, %v1119, 0.0
        %v1124 = vadd.f32 %v1122, 0.0
        %v1125 = vadd.f32 %v1123, 0.0
        %s1126 = sadd.s32 %s1106, 1
        %s1127 = sld [smem:[#allocation4 + %s1126]]
        %s1128 = smul.u32 %s1127, 2
        %s1129 = scalar_lea.vmem [#allocation8], %s1128
        %v1130 = vld [vmem:[%s1129] sm:$0x3]
        %v1132 = vlaneseq
        %v1133 = vshrl.u32 %v1132, 7
        %v1134 = vsub.s32 0, %v1133
        %v1135 = vrot.slane %v1130, %v1134
        %v1136 = vlaneseq
        %v1137 = vshrl.u32 %v1136, 7
        %v1138 = vsub.s32 1, %v1137
        %v1139 = vrot.slane %v1130, %v1138
        %v1142 = vsel %vm358, %v1135, 0.0
        %v1143 = vsel %vm358, %v1139, 0.0
        %v1144 = vadd.f32 %v1124, %v1142
        %v1145 = vadd.f32 %v1125, %v1143
        %1146 = vmatprep.subr.mxu0 %v259
        %1147 = vmatpush1.msra.mxu0 %v258
        %1148 = vmatprep.subr.mxu0 %v261
        %1149 = vmatpush1.msra.mxu0 %v260
        %1150 = vmatprep.subr.mxu0 %v263
        %1151 = vmatpush1.msra.mxu0 %v262
        %1152 = vmatprep.subr.mxu0 %v265
        %1153 = vmatpush1.msra.mxu0 %v264
        %1154 = vmatprep.subr.mxu0 %v267
        %1155 = vmatpush1.msra.mxu0 %v266
        %1156 = vmatprep.subr.mxu0 %v269
        %1157 = vmatpush1.msra.mxu0 %v268
        %1158 = vmatprep.subr.mxu0 %v271
        %1159 = vmatpush1.msra.mxu0 %v270
        %1160 = vmatprep.subr.mxu0 %v273
        %1161 = vmatpush1.msra.mxu0 %v272
        %1162 = vmatprep.subr.mxu0 %v275
        %1163 = vmatpush1.msra.mxu0 %v274
        %1164 = vmatprep.subr.mxu0 %v277
        %1165 = vmatpush1.msra.mxu0 %v276
        %1166 = vmatprep.subr.mxu0 %v279
        %1167 = vmatpush1.msra.mxu0 %v278
        %1168 = vmatprep.subr.mxu0 %v281
        %1169 = vmatpush1.msra.mxu0 %v280
        %1170 = vmatprep.subr.mxu0 %v283
        %1171 = vmatpush1.msra.mxu0 %v282
        %1172 = vmatprep.subr.mxu0 %v285
        %1173 = vmatpush1.msra.mxu0 %v284
        %1174 = vmatprep.subr.mxu0 %v287
        %1175 = vmatpush1.msra.mxu0 %v286
        %1176 = vmatprep.subr.mxu0 %v289
        %1177 = vmatpush1.msra.mxu0 %v288
        %1178 = vmatprep.subr.mxu0 %v291
        %1179 = vmatpush1.msra.mxu0 %v290
        %1180 = vmatprep.subr.mxu0 %v293
        %1181 = vmatpush1.msra.mxu0 %v292
        %1182 = vmatprep.subr.mxu0 %v295
        %1183 = vmatpush1.msra.mxu0 %v294
        %1184 = vmatprep.subr.mxu0 %v297
        %1185 = vmatpush1.msra.mxu0 %v296
        %1186 = vmatprep.subr.mxu0 %v299
        %1187 = vmatpush1.msra.mxu0 %v298
        %1188 = vmatprep.subr.mxu0 %v301
        %1189 = vmatpush1.msra.mxu0 %v300
        %1190 = vmatprep.subr.mxu0 %v303
        %1191 = vmatpush1.msra.mxu0 %v302
        %1192 = vmatprep.subr.mxu0 %v305
        %1193 = vmatpush1.msra.mxu0 %v304
        %1194 = vmatprep.subr.mxu0 %v307
        %1195 = vmatpush1.msra.mxu0 %v306
        %1196 = vmatprep.subr.mxu0 %v309
        %1197 = vmatpush1.msra.mxu0 %v308
        %1198 = vmatprep.subr.mxu0 %v311
        %1199 = vmatpush1.msra.mxu0 %v310
        %1200 = vmatprep.subr.mxu0 %v313
        %1201 = vmatpush1.msra.mxu0 %v312
        %1202 = vmatprep.subr.mxu0 %v315
        %1203 = vmatpush1.msra.mxu0 %v314
        %1204 = vmatprep.subr.mxu0 %v317
        %1205 = vmatpush1.msra.mxu0 %v316
        %1206 = vmatprep.subr.mxu0 %v319
        %1207 = vmatpush1.msra.mxu0 %v318
        %1208 = vmatprep.subr.mxu0 %v321
        %1209 = vmatpush1.msra.mxu0 %v320
        %1210 = vmatprep.mubr.f32.mxu0 %v1104
        %1211 = vmatmul.mubr.f32.gmra.mrb[0].mxu0 %v1103
        %v1212 = vpop.f32.mrb[0].mxu0
        %v1213 = vadd.f32 0.0, %v1212
        %v1214 = vpop.f32.mrb[0].mxu0
        %v1215 = vadd.f32 0.0, %v1214
        %1216 = vdwg.mxu0
        %v1217 = vadd.f32 %v1144, %v1213
        %v1218 = vadd.f32 %v1145, %v1215
        %v1219 = vadd.f32 %v1217, %v451
        %v1220 = vadd.f32 %v1218, %v455
        %v1221 = vtanh.pop %v1219
        %v1222 = vtanh.pop %v1220
        %s1223 = scalar_lea.vmem %s246, 96 [#allocation11]
        %1224 = vst [vmem:[%s1223] sm:$0xff] %v1221
        %1225 = vst [vmem:[%s1223 + $0x8] sm:$0xff] %v1222
        %p1226 = scmp.lt.s32.totalorder %s1105, 35
        %s1227 = scalar_select %p1226, 1, 0
        %v1228 = vstv %s1227
        %vm1229 = vcmp.eq.s32.totalorder %v1228, 1
        %v1230 = vsel %vm1229, %v1221, %v1103
        %v1231 = vsel %vm1229, %v1222, %v1104
        %s1232 = sadd.s32 %s327, 7
        %s1233 = smul.u32 %s1232, 2
        %s1234 = sld [smem:[#allocation4 + %s1233]]
        %s1235 = smul.u32 %s1234, 2
        %s1236 = scalar_lea.vmem [#allocation8], %s1235
        %v1237 = vld [vmem:[%s1236] sm:$0x3]
        %v1239 = vlaneseq
        %v1240 = vshrl.u32 %v1239, 7
        %v1241 = vsub.s32 0, %v1240
        %v1242 = vrot.slane %v1237, %v1241
        %v1243 = vlaneseq
        %v1244 = vshrl.u32 %v1243, 7
        %v1245 = vsub.s32 1, %v1244
        %v1246 = vrot.slane %v1237, %v1245
        %v1249 = vsel %vm335, %v1242, 0.0
        %v1250 = vsel %vm335, %v1246, 0.0
        %v1251 = vadd.f32 %v1249, 0.0
        %v1252 = vadd.f32 %v1250, 0.0
        %s1253 = sadd.s32 %s1233, 1
        %s1254 = sld [smem:[#allocation4 + %s1253]]
        %s1255 = smul.u32 %s1254, 2
        %s1256 = scalar_lea.vmem [#allocation8], %s1255
        %v1257 = vld [vmem:[%s1256] sm:$0x3]
        %v1259 = vlaneseq
        %v1260 = vshrl.u32 %v1259, 7
        %v1261 = vsub.s32 0, %v1260
        %v1262 = vrot.slane %v1257, %v1261
        %v1263 = vlaneseq
        %v1264 = vshrl.u32 %v1263, 7
        %v1265 = vsub.s32 1, %v1264
        %v1266 = vrot.slane %v1257, %v1265
        %v1269 = vsel %vm358, %v1262, 0.0
        %v1270 = vsel %vm358, %v1266, 0.0
        %v1271 = vadd.f32 %v1251, %v1269
        %v1272 = vadd.f32 %v1252, %v1270
        %1273 = vmatprep.subr.mxu0 %v259
        %1274 = vmatpush1.msra.mxu0 %v258
        %1275 = vmatprep.subr.mxu0 %v261
        %1276 = vmatpush1.msra.mxu0 %v260
        %1277 = vmatprep.subr.mxu0 %v263
        %1278 = vmatpush1.msra.mxu0 %v262
        %1279 = vmatprep.subr.mxu0 %v265
        %1280 = vmatpush1.msra.mxu0 %v264
        %1281 = vmatprep.subr.mxu0 %v267
        %1282 = vmatpush1.msra.mxu0 %v266
        %1283 = vmatprep.subr.mxu0 %v269
        %1284 = vmatpush1.msra.mxu0 %v268
        %1285 = vmatprep.subr.mxu0 %v271
        %1286 = vmatpush1.msra.mxu0 %v270
        %1287 = vmatprep.subr.mxu0 %v273
        %1288 = vmatpush1.msra.mxu0 %v272
        %1289 = vmatprep.subr.mxu0 %v275
        %1290 = vmatpush1.msra.mxu0 %v274
        %1291 = vmatprep.subr.mxu0 %v277
        %1292 = vmatpush1.msra.mxu0 %v276
        %1293 = vmatprep.subr.mxu0 %v279
        %1294 = vmatpush1.msra.mxu0 %v278
        %1295 = vmatprep.subr.mxu0 %v281
        %1296 = vmatpush1.msra.mxu0 %v280
        %1297 = vmatprep.subr.mxu0 %v283
        %1298 = vmatpush1.msra.mxu0 %v282
        %1299 = vmatprep.subr.mxu0 %v285
        %1300 = vmatpush1.msra.mxu0 %v284
        %1301 = vmatprep.subr.mxu0 %v287
        %1302 = vmatpush1.msra.mxu0 %v286
        %1303 = vmatprep.subr.mxu0 %v289
        %1304 = vmatpush1.msra.mxu0 %v288
        %1305 = vmatprep.subr.mxu0 %v291
        %1306 = vmatpush1.msra.mxu0 %v290
        %1307 = vmatprep.subr.mxu0 %v293
        %1308 = vmatpush1.msra.mxu0 %v292
        %1309 = vmatprep.subr.mxu0 %v295
        %1310 = vmatpush1.msra.mxu0 %v294
        %1311 = vmatprep.subr.mxu0 %v297
        %1312 = vmatpush1.msra.mxu0 %v296
        %1313 = vmatprep.subr.mxu0 %v299
        %1314 = vmatpush1.msra.mxu0 %v298
        %1315 = vmatprep.subr.mxu0 %v301
        %1316 = vmatpush1.msra.mxu0 %v300
        %1317 = vmatprep.subr.mxu0 %v303
        %1318 = vmatpush1.msra.mxu0 %v302
        %1319 = vmatprep.subr.mxu0 %v305
        %1320 = vmatpush1.msra.mxu0 %v304
        %1321 = vmatprep.subr.mxu0 %v307
        %1322 = vmatpush1.msra.mxu0 %v306
        %1323 = vmatprep.subr.mxu0 %v309
        %1324 = vmatpush1.msra.mxu0 %v308
        %1325 = vmatprep.subr.mxu0 %v311
        %1326 = vmatpush1.msra.mxu0 %v310
        %1327 = vmatprep.subr.mxu0 %v313
        %1328 = vmatpush1.msra.mxu0 %v312
        %1329 = vmatprep.subr.mxu0 %v315
        %1330 = vmatpush1.msra.mxu0 %v314
        %1331 = vmatprep.subr.mxu0 %v317
        %1332 = vmatpush1.msra.mxu0 %v316
        %1333 = vmatprep.subr.mxu0 %v319
        %1334 = vmatpush1.msra.mxu0 %v318
        %1335 = vmatprep.subr.mxu0 %v321
        %1336 = vmatpush1.msra.mxu0 %v320
        %1337 = vmatprep.mubr.f32.mxu0 %v1231
        %1338 = vmatmul.mubr.f32.gmra.mrb[0].mxu0 %v1230
        %v1339 = vpop.f32.mrb[0].mxu0
        %v1340 = vadd.f32 0.0, %v1339
        %v1341 = vpop.f32.mrb[0].mxu0
        %v1342 = vadd.f32 0.0, %v1341
        %1343 = vdwg.mxu0
        %v1344 = vadd.f32 %v1271, %v1340
        %v1345 = vadd.f32 %v1272, %v1342
        %v1346 = vadd.f32 %v1344, %v451
        %v1347 = vadd.f32 %v1345, %v455
        %v1348 = vtanh.pop %v1346
        %v1349 = vtanh.pop %v1347
        %s1350 = scalar_lea.vmem %s246, 112 [#allocation11]
        %1351 = vst [vmem:[%s1350] sm:$0xff] %v1348
        %1352 = vst [vmem:[%s1350 + $0x8] sm:$0xff] %v1349
        %p1353 = scmp.lt.s32.totalorder %s1232, 35
        %s1354 = scalar_select %p1353, 1, 0
        %v1355 = vstv %s1354
        %vm1356 = vcmp.eq.s32.totalorder %v1355, 1
        %v1357 = vsel %vm1356, %v1348, %v1230
        %v1358 = vsel %vm1356, %v1349, %v1231
        %1359 = vst [vmem:[#allocation2] sm:$0xff] %v1357
        %1360 = vst [vmem:[#allocation2 + $0x8] sm:$0xff] %v1358
        %p1361 = scmp.eq.s32.totalorder %s28, 4
        // Predicated region
        $region53: #{tpu_custom_call.1} parent=35 // pred_check
          %p1362 = pneg %p1361
        $region54: #{tpu_custom_call.1} parent=35 // pred_check_branch
          %1364 = sbr.rel (%p1362) target = $region56
        $region55: #{tpu_custom_call.1} parent=35 // pred_region
          %1365 = vst [vmem:[#allocation12] sm:$0xff] %v1357
          %1366 = vst [vmem:[#allocation12 + $0x8] sm:$0xff] %v1358
        $region56: #{tpu_custom_call.1} parent=35 // pred_fallthru
          _
        %s1367 = sand.u32 %s120, 1
        %s1368 = scalar_lea.sflag [#allocation7], %s1367
        %s1369 = sand.u32 %s120, 1
        %s1370 = smul.addr %s1369, 128
        %s1371 = scalar_lea.vmem [#allocation11], %s1370
        // Predicated region
        $region57: #{tpu_custom_call.1} parent=35 // pred_check
          %p1372 = pneg %p130
        $region58: #{tpu_custom_call.1} parent=35 // pred_check_branch
          %1374 = sbr.rel (%p1372) target = $region60
        $region59: #{tpu_custom_call.1} parent=35 // pred_region
          %s1375 = smul.u32 8, %s28
          %s1377 = ssub.s32 2048, 2048
          %1378 = vsyncadd %s1368, %s1377
          %s1379 = smul.addr %s1375, 2
          %s1380 = smul.addr %s1379, 128
          %s1381 = scalar_lea.hbm %s5, %s1380
          %s1382 = sshll.u32 %s1371, 4
          %s1383 = int_to_ptr.vmem [resolvable:$true] %s1382
          %1388 = dma.vmem_to_hbm [thread:$0]  %s1383, 2048, %s1381, %s1368, 256, 256, 16
        $region60: #{tpu_custom_call.1} parent=35 // pred_fallthru
          _
        // Predicated region
        $region61: #{tpu_custom_call.1} parent=35 // pred_check
          %p1389 = pneg %p151
        $region62: #{tpu_custom_call.1} parent=35 // pred_check_branch
          %1391 = sbr.rel (%p1389) target = $region64
        $region63: #{tpu_custom_call.1} parent=35 // pred_region
          %s1393 = ssub.s32 256, 256
          %1394 = vsyncadd [#allocation13], %s1393
          %s1396 = sshll.u32 [#allocation12], 4
          %s1397 = int_to_ptr.vmem [resolvable:$true] %s1396
          %1399 = dma.vmem_to_hbm [thread:$0]  %s1397, 256, %s6, [#allocation13]
        $region64: #{tpu_custom_call.1} parent=35 // pred_fallthru
          _
        // Predicated region
        $region65: #{tpu_custom_call.1} parent=35 // pred_check
          %p1400 = pneg %p151
        $region66: #{tpu_custom_call.1} parent=35 // pred_check_branch
          %1402 = sbr.rel (%p1400) target = $region68
        $region67: #{tpu_custom_call.1} parent=35 // pred_region
          %1403 = dma.done [#allocation13], 256
        $region68: #{tpu_custom_call.1} parent=35 // pred_fallthru
          _
      $region36: #{tpu_custom_call.1} parent=5 // pred_fallthru
        _
      %p1404 = scmp.le.s32.totalorder 2, %s23
      // Predicated region
      $region69: #{tpu_custom_call.1} parent=5 // pred_check
        %p1405 = pneg %p1404
      $region70: #{tpu_custom_call.1} parent=5 // pred_check_branch
        %1407 = sbr.rel (%p1405) target = $region72
      $region71: #{tpu_custom_call.1} parent=5 // pred_region
        %s1408 = ssub.s32 %s23, 2
        // Predicated region
        $region73: #{tpu_custom_call.1} parent=71 // pred_check
          %p1409 = pneg %p136
        $region74: #{tpu_custom_call.1} parent=71 // pred_check_branch
          %1411 = sbr.rel (%p1409) target = $region76
        $region75: #{tpu_custom_call.1} parent=71 // pred_region
          %s1412 = sand.u32 %s121, 1
          %s1413 = scalar_lea.sflag [#allocation7], %s1412
          %s1414 = sand.u32 %s121, 1
          %s1415 = smul.addr %s1414, 128
          %s1416 = scalar_lea.vmem [#allocation11], %s1415
          %1417 = dma.done %s1413, 2048
        $region76: #{tpu_custom_call.1} parent=71 // pred_fallthru
          _
      $region72: #{tpu_custom_call.1} parent=5 // pred_fallthru
        _
    $region6: #{tpu_custom_call.1} parent=1 // loop_footer
      %s27 = sadd.s32 1, %s23
    $region7: #{tpu_custom_call.1} parent=1 // loop_footer_branch
      %22 = sbr.rel target = $region3
    $region8: #{tpu_custom_call.1} parent=1 // loop_exit
      _
    %1418 = vsyncpa [#allocation6], 1
    %s1419 = scalar_lea.sflag [#allocation6], 1
    %1420 = vsyncpa %s1419, 1
    %1421 = vsyncpa [#allocation9], 1
    %1422 = vsyncpa [#allocation7], 1
    %s1423 = scalar_lea.sflag [#allocation7], 1
    %1424 = vsyncpa %s1423, 1
    %1425 = vsyncpa [#allocation13], 1

</llo_original>
